<compile_context>
chip_gen: v7x
topology: tpu7x:2x2x1
jax: 0.10.0
libtpu: 0.0.40
codegen_flags: <defaults>
</compile_context>

<pallas_src>
import jax
import jax.numpy as jnp
from jax.experimental import pallas as pl
from jax.experimental.pallas import tpu as pltpu

D_IN, D_H1, D_H2, D_Z = 784, 256, 512, 2
D_HEAD = 2 * D_Z          # fused mean||logvar head width
TM = 128                  # batch tile (rows per grid step)


def encoder_kernel(x_ref, w1_ref, b1_ref, w2_ref, b2_ref, w3_ref, b3_ref,
                   out_ref, h2_ref):
    # fc1 + ReLU  (MXU matmul, f32 accumulation)
    h1 = jnp.dot(x_ref[...], w1_ref[...], preferred_element_type=jnp.float32)
    h1 = jnp.maximum(h1 + b1_ref[...], 0.0)
    # fc2 + tanh, staged in explicit VMEM scratch
    h2_ref[...] = jnp.tanh(
        jnp.dot(h1, w2_ref[...], preferred_element_type=jnp.float32) + b2_ref[...]
    )
    # fused mean/logvar head: single (TM,512) @ (512,4) matmul
    out_ref[...] = (
        jnp.dot(h2_ref[...], w3_ref[...], preferred_element_type=jnp.float32)
        + b3_ref[...]
    )


def encoder_forward(x, params):
    """x: (B, 784) f32.  Returns (mean, logvar), each (B, 2) f32."""
    B = x.shape[0]
    w1, b1, w2, b2, w3m, b3m, w3v, b3v = params

    # Fuse the two heads: (512, 4) weight, (1, 4) bias.
    w3 = jnp.concatenate([w3m, w3v], axis=1)
    b3 = jnp.concatenate([b3m, b3v], axis=1)

    # Pad batch up to a multiple of TM so the grid tiles evenly.
    Bp = ((B + TM - 1) // TM) * TM
    if Bp != B:
        x = jnp.pad(x, ((0, Bp - B), (0, 0)))
    nb = Bp // TM

    def resident(shape):
        # whole array in VMEM, same block every grid step (no re-DMA)
        return pl.BlockSpec(shape, lambda i: tuple(0 for _ in shape))

    in_specs = [
        pl.BlockSpec((TM, D_IN), lambda i: (i, 0)),   # x tile streams per step
        resident(w1.shape), resident(b1.shape),
        resident(w2.shape), resident(b2.shape),
        resident(w3.shape), resident(b3.shape),
    ]
    out_specs = pl.BlockSpec((TM, D_HEAD), lambda i: (i, 0))

    # VMEM budget: double-buffered x/out tiles + resident weights + h2 scratch.
    weight_bytes = 4 * (D_IN * D_H1 + D_H1 * D_H2 + D_H2 * D_HEAD
                        + D_H1 + D_H2 + D_HEAD)
    tile_bytes = 4 * (TM * D_IN + TM * D_HEAD)
    scratch_bytes = 4 * TM * D_H2
    vmem_limit = 2 * weight_bytes + 2 * tile_bytes + scratch_bytes + (2 << 20)

    out = pl.pallas_call(
        encoder_kernel,
        out_shape=jax.ShapeDtypeStruct((Bp, D_HEAD), jnp.float32),
        grid=(nb,),
        in_specs=in_specs,
        out_specs=out_specs,
        scratch_shapes=[pltpu.VMEM((TM, D_H2), jnp.float32)],
        compiler_params=pltpu.CompilerParams(
            dimension_semantics=("parallel",),   # shard batch tiles across TCs (v7x)
            vmem_limit_bytes=vmem_limit,
        ),
    )(x, w1, b1, w2, b2, w3, b3)

    out = out[:B]
    return out[:, :D_Z], out[:, D_Z:]


def init_params(key):
    """Deterministic PyTorch-style (uniform fan_in) init; weights stored (in, out)."""
    ks = jax.random.split(key, 8)

    def linear(kw, kb, fan_in, fan_out):
        bound = 1.0 / (fan_in ** 0.5)
        w = jax.random.uniform(kw, (fan_in, fan_out), jnp.float32, -bound, bound)
        b = jax.random.uniform(kb, (1, fan_out), jnp.float32, -bound, bound)
        return w, b

    w1, b1 = linear(ks[0], ks[1], D_IN, D_H1)
    w2, b2 = linear(ks[2], ks[3], D_H1, D_H2)
    w3m, b3m = linear(ks[4], ks[5], D_H2, D_Z)
    w3v, b3v = linear(ks[6], ks[7], D_H2, D_Z)
    return (w1, b1, w2, b2, w3m, b3m, w3v, b3v)


def encoder_ref(x, params):
    """Pure-JAX reference for verification."""
    w1, b1, w2, b2, w3m, b3m, w3v, b3v = params
    h1 = jnp.maximum(x @ w1 + b1, 0.0)
    h2 = jnp.tanh(h1 @ w2 + b2)
    return h2 @ w3m + b3m, h2 @ w3v + b3v


if __name__ == "__main__":
    key = jax.random.PRNGKey(0)
    k_param, k_x = jax.random.split(key)

    params = init_params(k_param)
    B = 256  # two batch tiles -> exercises the pipelined grid
    x = jax.random.normal(k_x, (B, D_IN), jnp.float32)

    mean, logvar = encoder_forward(x, params)
    jax.block_until_ready((mean, logvar))

    mean_ref, logvar_ref = encoder_ref(x, params)
    assert mean.shape == (B, D_Z) and logvar.shape == (B, D_Z)
    assert jnp.allclose(mean, mean_ref, atol=1e-4, rtol=1e-4)
    assert jnp.allclose(logvar, logvar_ref, atol=1e-4, rtol=1e-4)

    print("KERNEL_OK")
</pallas_src>

<mosaic_0001>
module attributes {stable_mosaic.version = 11 : i64} {
  func.func @encoder_kernel(%arg0: i32, %arg1: memref<128x784xf32, #tpu.memory_space<vmem>>, %arg2: memref<784x256xf32, #tpu.memory_space<vmem>>, %arg3: memref<1x256xf32, #tpu.memory_space<vmem>>, %arg4: memref<256x512xf32, #tpu.memory_space<vmem>>, %arg5: memref<1x512xf32, #tpu.memory_space<vmem>>, %arg6: memref<512x4xf32, #tpu.memory_space<vmem>>, %arg7: memref<1x4xf32, #tpu.memory_space<vmem>>, %arg8: memref<128x4xf32, #tpu.memory_space<vmem>>, %arg9: memref<128x512xf32, #tpu.memory_space<vmem>>) attributes {dimension_semantics = [#tpu.dimension_semantics<parallel>], iteration_bounds = array<i64: 2>, scalar_prefetch = 0 : i64, scratch_operands = 1 : i64, tpu.core_type = #tpu.core_type<tc>, window_params = [{transform_indices = @transform_0, window_bounds = array<i64: 128, 784>}, {pipeline_mode = #tpu.pipeline_mode<synchronous>, transform_indices = @transform_1, window_bounds = array<i64: 784, 256>}, {pipeline_mode = #tpu.pipeline_mode<synchronous>, transform_indices = @transform_2, window_bounds = array<i64: 1, 256>}, {pipeline_mode = #tpu.pipeline_mode<synchronous>, transform_indices = @transform_3, window_bounds = array<i64: 256, 512>}, {pipeline_mode = #tpu.pipeline_mode<synchronous>, transform_indices = @transform_4, window_bounds = array<i64: 1, 512>}, {pipeline_mode = #tpu.pipeline_mode<synchronous>, transform_indices = @transform_5, window_bounds = array<i64: 512, 4>}, {pipeline_mode = #tpu.pipeline_mode<synchronous>, transform_indices = @transform_6, window_bounds = array<i64: 1, 4>}, {transform_indices = @transform_7, window_bounds = array<i64: 128, 4>}]} {
    %c0 = arith.constant 0 : index
    %c0_0 = arith.constant 0 : index
    %0 = vector.load %arg1[%c0, %c0_0] : memref<128x784xf32, #tpu.memory_space<vmem>>, vector<128x784xf32>
    %c0_1 = arith.constant 0 : index
    %c0_2 = arith.constant 0 : index
    %1 = vector.load %arg2[%c0_1, %c0_2] : memref<784x256xf32, #tpu.memory_space<vmem>>, vector<784x256xf32>
    %cst = arith.constant dense<0.000000e+00> : vector<128x256xf32>
    %2 = tpu.matmul %0, %1, %cst {dimension_numbers = #tpu.dot_dimension_numbers<[1], [0], [0], [1], [0, 0, 1, 1], [], []>} : vector<128x784xf32>, vector<784x256xf32>, vector<128x256xf32> -> vector<128x256xf32>
    %c0_3 = arith.constant 0 : index
    %c0_4 = arith.constant 0 : index
    %3 = vector.load %arg3[%c0_3, %c0_4] : memref<1x256xf32, #tpu.memory_space<vmem>>, vector<1x256xf32>
    %4 = vector.broadcast %3 : vector<1x256xf32> to vector<128x256xf32>
    %5 = arith.addf %2, %4 : vector<128x256xf32>
    %cst_5 = arith.constant 0.000000e+00 : f32
    %6 = vector.broadcast %cst_5 : f32 to vector<128x256xf32>
    %7 = arith.maximumf %5, %6 : vector<128x256xf32>
    %c0_6 = arith.constant 0 : index
    %c0_7 = arith.constant 0 : index
    %8 = vector.load %arg4[%c0_6, %c0_7] : memref<256x512xf32, #tpu.memory_space<vmem>>, vector<256x512xf32>
    %cst_8 = arith.constant dense<0.000000e+00> : vector<128x512xf32>
    %9 = tpu.matmul %7, %8, %cst_8 {dimension_numbers = #tpu.dot_dimension_numbers<[1], [0], [0], [1], [0, 0, 1, 1], [], []>} : vector<128x256xf32>, vector<256x512xf32>, vector<128x512xf32> -> vector<128x512xf32>
    %c0_9 = arith.constant 0 : index
    %c0_10 = arith.constant 0 : index
    %10 = vector.load %arg5[%c0_9, %c0_10] : memref<1x512xf32, #tpu.memory_space<vmem>>, vector<1x512xf32>
    %11 = vector.broadcast %10 : vector<1x512xf32> to vector<128x512xf32>
    %12 = arith.addf %9, %11 : vector<128x512xf32>
    %13 = math.tanh %12 : vector<128x512xf32>
    %c0_11 = arith.constant 0 : index
    %c0_12 = arith.constant 0 : index
    %14 = vector.load %arg9[%c0_11, %c0_12] : memref<128x512xf32, #tpu.memory_space<vmem>>, vector<128x512xf32>
    tpu.vector_store %arg9[%c0_11, %c0_12], %13 {strides = array<i32>} : memref<128x512xf32, #tpu.memory_space<vmem>>, vector<128x512xf32>,
    %c0_13 = arith.constant 0 : index
    %c0_14 = arith.constant 0 : index
    %15 = vector.load %arg9[%c0_13, %c0_14] : memref<128x512xf32, #tpu.memory_space<vmem>>, vector<128x512xf32>
    %c0_15 = arith.constant 0 : index
    %c0_16 = arith.constant 0 : index
    %16 = vector.load %arg6[%c0_15, %c0_16] : memref<512x4xf32, #tpu.memory_space<vmem>>, vector<512x4xf32>
    %cst_17 = arith.constant dense<0.000000e+00> : vector<128x4xf32>
    %17 = tpu.matmul %15, %16, %cst_17 {dimension_numbers = #tpu.dot_dimension_numbers<[1], [0], [0], [1], [0, 0, 1, 1], [], []>} : vector<128x512xf32>, vector<512x4xf32>, vector<128x4xf32> -> vector<128x4xf32>
    %c0_18 = arith.constant 0 : index
    %c0_19 = arith.constant 0 : index
    %18 = vector.load %arg7[%c0_18, %c0_19] : memref<1x4xf32, #tpu.memory_space<vmem>>, vector<1x4xf32>
    %19 = vector.broadcast %18 : vector<1x4xf32> to vector<128x4xf32>
    %20 = arith.addf %17, %19 : vector<128x4xf32>
    %c0_20 = arith.constant 0 : index
    %c0_21 = arith.constant 0 : index
    %21 = vector.load %arg8[%c0_20, %c0_21] : memref<128x4xf32, #tpu.memory_space<vmem>>, vector<128x4xf32>
    tpu.vector_store %arg8[%c0_20, %c0_21], %20 {strides = array<i32>} : memref<128x4xf32, #tpu.memory_space<vmem>>, vector<128x4xf32>,
    return
  }
  func.func @transform_0(%arg0: i32) -> (i32, i32) {
    %c0_i32 = arith.constant 0 : i32
    %c0_i32_0 = arith.constant 0 : i32
    return %arg0, %c0_i32 : i32, i32
  }
  func.func @transform_1(%arg0: i32) -> (i32, i32) {
    %c0_i32 = arith.constant 0 : i32
    %c0_i32_0 = arith.constant 0 : i32
    %c0_i32_1 = arith.constant 0 : i32
    return %c0_i32, %c0_i32_0 : i32, i32
  }
  func.func @transform_2(%arg0: i32) -> (i32, i32) {
    %c0_i32 = arith.constant 0 : i32
    %c0_i32_0 = arith.constant 0 : i32
    %c0_i32_1 = arith.constant 0 : i32
    return %c0_i32, %c0_i32_0 : i32, i32
  }
  func.func @transform_3(%arg0: i32) -> (i32, i32) {
    %c0_i32 = arith.constant 0 : i32
    %c0_i32_0 = arith.constant 0 : i32
    %c0_i32_1 = arith.constant 0 : i32
    return %c0_i32, %c0_i32_0 : i32, i32
  }
  func.func @transform_4(%arg0: i32) -> (i32, i32) {
    %c0_i32 = arith.constant 0 : i32
    %c0_i32_0 = arith.constant 0 : i32
    %c0_i32_1 = arith.constant 0 : i32
    return %c0_i32, %c0_i32_0 : i32, i32
  }
  func.func @transform_5(%arg0: i32) -> (i32, i32) {
    %c0_i32 = arith.constant 0 : i32
    %c0_i32_0 = arith.constant 0 : i32
    %c0_i32_1 = arith.constant 0 : i32
    return %c0_i32, %c0_i32_0 : i32, i32
  }
  func.func @transform_6(%arg0: i32) -> (i32, i32) {
    %c0_i32 = arith.constant 0 : i32
    %c0_i32_0 = arith.constant 0 : i32
    %c0_i32_1 = arith.constant 0 : i32
    return %c0_i32, %c0_i32_0 : i32, i32
  }
  func.func @transform_7(%arg0: i32) -> (i32, i32) {
    %c0_i32 = arith.constant 0 : i32
    %c0_i32_0 = arith.constant 0 : i32
    return %arg0, %c0_i32 : i32, i32
  }
}

</mosaic_0001>

<llo_original>
// kernel: tpu_custom_call.1
$region0: #{tpu_custom_call.1}
  #allocation0 [shape = 'u32[]', space=smem, size = 0x4, offset = 0x4, fixed_abs, tag = 'smem constant byte address 0x4 - core index']
  #allocation1 [shape = 'u32[144,128]{1,0:T(1,128)}', space=vmem, size = 0x12000, scoped, tag = 'internal scratch']
  #allocation2 [shape = 'f32[128,512]{1,0:T(8,128)}', space=vmem, size = 0x40000, scoped, tag = 'scratch operand']
  %s0 = inlined_call_operand.vmem [shape: f32[256,784], index: 0, kind: input, shape index: {}]
  %s1 = inlined_call_operand.vmem [shape: f32[784,256], index: 1, kind: input, shape index: {}]
  %s2 = inlined_call_operand.vmem [shape: f32[1,256], index: 2, kind: input, shape index: {}]
  %s3 = inlined_call_operand.vmem [shape: f32[256,512], index: 3, kind: input, shape index: {}]
  %s4 = inlined_call_operand.vmem [shape: f32[1,512], index: 4, kind: input, shape index: {}]
  %s5 = inlined_call_operand.vmem [shape: f32[512,4], index: 5, kind: input, shape index: {}]
  %s6 = inlined_call_operand.vmem [shape: f32[1,4], index: 6, kind: input, shape index: {}]
  %s7 = inlined_call_operand.vmem [shape: f32[256,4], index: 7, kind: output, shape index: {}]
  %s8 = sld [smem:[#allocation0]]
  $region61: #{tpu_custom_call.1} parent=0
    _
  %s10 = ssub.s32 1, %s8
  %s11 = scalar_select 0, %s10, %s8
  loop: start=0, step=1, limit=4
  $region2: #{tpu_custom_call.1} parent=0 // loop_pre_header
    _
  $region3: #{tpu_custom_call.1} parent=0 // loop_header
    %s13 = sphi 0, %s17
    %p14 = scmp.ge.s32.totalorder %s13, 4
    %s23 = sphi 0, %s25
    %s26 = sphi 0, %s23
    %s27 = sphi 0, %s26
    %s43 = sphi 0, %s27
    %s47 = sphi 0, %s47
    %s49 = sphi 0, %s47
    %s50 = sphi 0, %s49
    %s64 = sphi 0, %s50
    %s68 = sphi 0, %s68
    %s70 = sphi 0, %s68
    %s71 = sphi 0, %s70
    %s85 = sphi 0, %s71
    %s89 = sphi 0, %s89
    %s91 = sphi 0, %s89
    %s92 = sphi 0, %s91
    %s106 = sphi 0, %s92
    %s110 = sphi 0, %s110
    %s112 = sphi 0, %s110
    %s113 = sphi 0, %s112
    %s127 = sphi 0, %s113
    %s131 = sphi 0, %s131
    %s133 = sphi 0, %s131
    %s134 = sphi 0, %s133
    %s148 = sphi 0, %s134
    %s152 = sphi 0, %s152
    %s154 = sphi 0, %s152
    %s155 = sphi 0, %s154
    %s169 = sphi 0, %s155
    %s175 = sphi 0, %s177
    %s178 = sphi 0, %s175
    %s179 = sphi 0, %s178
    %s195 = sphi 0, %s179
  $region4: #{tpu_custom_call.1} parent=0 // loop_header_branch
    %16 = sbr.rel (%p14) target = $region8
  $region5: #{tpu_custom_call.1} parent=0 // loop_body
    %s18 = ssub.s32 %s13, 1
    %s19 = ssub.s32 %s13, 2
    %s20 = sadd.s32 %s13, 1
    %s21 = ssub.s32 %s13, %s20
    %p22 = scmp.eq.s32.totalorder %s21, 0
    %s24 = sadd.s32 %s23, 1
    %s25 = scalar_select %p22, %s23, %s24
    %p28 = pneg %p22
    %p29 = scmp.eq.s32.totalorder %s13, 1
    %p30 = por %p28, %p29
    %p31 = scmp.ne.s32.totalorder %s23, %s26
    %p32 = scmp.eq.s32.totalorder %s13, 0
    %p33 = por %p31, %p32
    %p34 = scmp.ne.s32.totalorder %s23, %s26
    %p35 = scmp.eq.s32.totalorder %s18, 1
    %p36 = por %p34, %p35
    %p37 = scmp.ne.s32.totalorder %s26, %s27
    %p38 = scmp.eq.s32.totalorder %s18, 0
    %p39 = por %p37, %p38
    %p40 = scmp.ne.s32.totalorder %s26, %s27
    %p41 = scmp.eq.s32.totalorder %s19, 1
    %p42 = por %p40, %p41
    %p44 = scmp.ne.s32.totalorder %s27, %s43
    %p45 = scmp.eq.s32.totalorder %s19, 0
    %p46 = por %p44, %p45
    %s48 = sadd.s32 %s47, 1
    %p51 = scmp.eq.s32.totalorder %s13, 1
    %p52 = scmp.ne.s32.totalorder %s47, %s49
    %p53 = scmp.eq.s32.totalorder %s13, 0
    %p54 = por %p52, %p53
    %p55 = scmp.ne.s32.totalorder %s47, %s49
    %p56 = scmp.eq.s32.totalorder %s18, 1
    %p57 = por %p55, %p56
    %p58 = scmp.ne.s32.totalorder %s49, %s50
    %p59 = scmp.eq.s32.totalorder %s18, 0
    %p60 = por %p58, %p59
    %p61 = scmp.ne.s32.totalorder %s49, %s50
    %p62 = scmp.eq.s32.totalorder %s19, 1
    %p63 = por %p61, %p62
    %p65 = scmp.ne.s32.totalorder %s50, %s64
    %p66 = scmp.eq.s32.totalorder %s19, 0
    %p67 = por %p65, %p66
    %s69 = sadd.s32 %s68, 1
    %p72 = scmp.eq.s32.totalorder %s13, 1
    %p73 = scmp.ne.s32.totalorder %s68, %s70
    %p74 = scmp.eq.s32.totalorder %s13, 0
    %p75 = por %p73, %p74
    %p76 = scmp.ne.s32.totalorder %s68, %s70
    %p77 = scmp.eq.s32.totalorder %s18, 1
    %p78 = por %p76, %p77
    %p79 = scmp.ne.s32.totalorder %s70, %s71
    %p80 = scmp.eq.s32.totalorder %s18, 0
    %p81 = por %p79, %p80
    %p82 = scmp.ne.s32.totalorder %s70, %s71
    %p83 = scmp.eq.s32.totalorder %s19, 1
    %p84 = por %p82, %p83
    %p86 = scmp.ne.s32.totalorder %s71, %s85
    %p87 = scmp.eq.s32.totalorder %s19, 0
    %p88 = por %p86, %p87
    %s90 = sadd.s32 %s89, 1
    %p93 = scmp.eq.s32.totalorder %s13, 1
    %p94 = scmp.ne.s32.totalorder %s89, %s91
    %p95 = scmp.eq.s32.totalorder %s13, 0
    %p96 = por %p94, %p95
    %p97 = scmp.ne.s32.totalorder %s89, %s91
    %p98 = scmp.eq.s32.totalorder %s18, 1
    %p99 = por %p97, %p98
    %p100 = scmp.ne.s32.totalorder %s91, %s92
    %p101 = scmp.eq.s32.totalorder %s18, 0
    %p102 = por %p100, %p101
    %p103 = scmp.ne.s32.totalorder %s91, %s92
    %p104 = scmp.eq.s32.totalorder %s19, 1
    %p105 = por %p103, %p104
    %p107 = scmp.ne.s32.totalorder %s92, %s106
    %p108 = scmp.eq.s32.totalorder %s19, 0
    %p109 = por %p107, %p108
    %s111 = sadd.s32 %s110, 1
    %p114 = scmp.eq.s32.totalorder %s13, 1
    %p115 = scmp.ne.s32.totalorder %s110, %s112
    %p116 = scmp.eq.s32.totalorder %s13, 0
    %p117 = por %p115, %p116
    %p118 = scmp.ne.s32.totalorder %s110, %s112
    %p119 = scmp.eq.s32.totalorder %s18, 1
    %p120 = por %p118, %p119
    %p121 = scmp.ne.s32.totalorder %s112, %s113
    %p122 = scmp.eq.s32.totalorder %s18, 0
    %p123 = por %p121, %p122
    %p124 = scmp.ne.s32.totalorder %s112, %s113
    %p125 = scmp.eq.s32.totalorder %s19, 1
    %p126 = por %p124, %p125
    %p128 = scmp.ne.s32.totalorder %s113, %s127
    %p129 = scmp.eq.s32.totalorder %s19, 0
    %p130 = por %p128, %p129
    %s132 = sadd.s32 %s131, 1
    %p135 = scmp.eq.s32.totalorder %s13, 1
    %p136 = scmp.ne.s32.totalorder %s131, %s133
    %p137 = scmp.eq.s32.totalorder %s13, 0
    %p138 = por %p136, %p137
    %p139 = scmp.ne.s32.totalorder %s131, %s133
    %p140 = scmp.eq.s32.totalorder %s18, 1
    %p141 = por %p139, %p140
    %p142 = scmp.ne.s32.totalorder %s133, %s134
    %p143 = scmp.eq.s32.totalorder %s18, 0
    %p144 = por %p142, %p143
    %p145 = scmp.ne.s32.totalorder %s133, %s134
    %p146 = scmp.eq.s32.totalorder %s19, 1
    %p147 = por %p145, %p146
    %p149 = scmp.ne.s32.totalorder %s134, %s148
    %p150 = scmp.eq.s32.totalorder %s19, 0
    %p151 = por %p149, %p150
    %s153 = sadd.s32 %s152, 1
    %p156 = scmp.eq.s32.totalorder %s13, 1
    %p157 = scmp.ne.s32.totalorder %s152, %s154
    %p158 = scmp.eq.s32.totalorder %s13, 0
    %p159 = por %p157, %p158
    %p160 = scmp.ne.s32.totalorder %s152, %s154
    %p161 = scmp.eq.s32.totalorder %s18, 1
    %p162 = por %p160, %p161
    %p163 = scmp.ne.s32.totalorder %s154, %s155
    %p164 = scmp.eq.s32.totalorder %s18, 0
    %p165 = por %p163, %p164
    %p166 = scmp.ne.s32.totalorder %s154, %s155
    %p167 = scmp.eq.s32.totalorder %s19, 1
    %p168 = por %p166, %p167
    %p170 = scmp.ne.s32.totalorder %s155, %s169
    %p171 = scmp.eq.s32.totalorder %s19, 0
    %p172 = por %p170, %p171
    %s173 = ssub.s32 %s13, %s20
    %p174 = scmp.eq.s32.totalorder %s173, 0
    %s176 = sadd.s32 %s175, 1
    %s177 = scalar_select %p174, %s175, %s176
    %p180 = pneg %p174
    %p181 = scmp.eq.s32.totalorder %s13, 1
    %p182 = por %p180, %p181
    %p183 = scmp.ne.s32.totalorder %s175, %s178
    %p184 = scmp.eq.s32.totalorder %s13, 0
    %p185 = por %p183, %p184
    %p186 = scmp.ne.s32.totalorder %s175, %s178
    %p187 = scmp.eq.s32.totalorder %s18, 1
    %p188 = por %p186, %p187
    %p189 = scmp.ne.s32.totalorder %s178, %s179
    %p190 = scmp.eq.s32.totalorder %s18, 0
    %p191 = por %p189, %p190
    %p192 = scmp.ne.s32.totalorder %s178, %s179
    %p193 = scmp.eq.s32.totalorder %s19, 1
    %p194 = por %p192, %p193
    %p196 = scmp.ne.s32.totalorder %s179, %s195
    %p197 = scmp.eq.s32.totalorder %s19, 0
    %p198 = por %p196, %p197
    %p199 = scmp.le.s32.totalorder 1, %s13
    %p200 = scmp.lt.s32.totalorder %s13, 3
    %p201 = pnand %p199, %p200
    %p202 = pneg %p201
    // Predicated region
    $region9: #{tpu_custom_call.1} parent=5 // pred_check
      _
    $region10: #{tpu_custom_call.1} parent=5 // pred_check_branch
      %204 = sbr.rel (%p201) target = $region12
    $region11: #{tpu_custom_call.1} parent=5 // pred_region
      %s205 = ssub.s32 %s13, 1
      // Predicated region
      $region13: #{tpu_custom_call.1} parent=11 // pred_check
        %p206 = pneg %p60
      $region14: #{tpu_custom_call.1} parent=11 // pred_check_branch
        %208 = sbr.rel (%p206) target = $region16
      $region15: #{tpu_custom_call.1} parent=11 // pred_region
        _
      $region16: #{tpu_custom_call.1} parent=11 // pred_fallthru
        _
      // Predicated region
      $region17: #{tpu_custom_call.1} parent=11 // pred_check
        %p209 = pneg %p81
      $region18: #{tpu_custom_call.1} parent=11 // pred_check_branch
        %211 = sbr.rel (%p209) target = $region20
      $region19: #{tpu_custom_call.1} parent=11 // pred_region
        _
      $region20: #{tpu_custom_call.1} parent=11 // pred_fallthru
        _
      // Predicated region
      $region21: #{tpu_custom_call.1} parent=11 // pred_check
        %p212 = pneg %p102
      $region22: #{tpu_custom_call.1} parent=11 // pred_check_branch
        %214 = sbr.rel (%p212) target = $region24
      $region23: #{tpu_custom_call.1} parent=11 // pred_region
        _
      $region24: #{tpu_custom_call.1} parent=11 // pred_fallthru
        _
      // Predicated region
      $region25: #{tpu_custom_call.1} parent=11 // pred_check
        %p215 = pneg %p123
      $region26: #{tpu_custom_call.1} parent=11 // pred_check_branch
        %217 = sbr.rel (%p215) target = $region28
      $region27: #{tpu_custom_call.1} parent=11 // pred_region
        _
      $region28: #{tpu_custom_call.1} parent=11 // pred_fallthru
        _
      // Predicated region
      $region29: #{tpu_custom_call.1} parent=11 // pred_check
        %p218 = pneg %p144
      $region30: #{tpu_custom_call.1} parent=11 // pred_check_branch
        %220 = sbr.rel (%p218) target = $region32
      $region31: #{tpu_custom_call.1} parent=11 // pred_region
        _
      $region32: #{tpu_custom_call.1} parent=11 // pred_fallthru
        _
      // Predicated region
      $region33: #{tpu_custom_call.1} parent=11 // pred_check
        %p221 = pneg %p165
      $region34: #{tpu_custom_call.1} parent=11 // pred_check_branch
        %223 = sbr.rel (%p221) target = $region36
      $region35: #{tpu_custom_call.1} parent=11 // pred_region
        _
      $region36: #{tpu_custom_call.1} parent=11 // pred_fallthru
        _
    $region12: #{tpu_custom_call.1} parent=5 // pred_fallthru
      _
    %p224 = scmp.lt.s32.totalorder %s13, 2
    // Predicated region
    $region37: #{tpu_custom_call.1} parent=5 // pred_check
      %p225 = pneg %p224
    $region38: #{tpu_custom_call.1} parent=5 // pred_check_branch
      %227 = sbr.rel (%p225) target = $region40
    $region39: #{tpu_custom_call.1} parent=5 // pred_region
      // Predicated region
      $region41: #{tpu_custom_call.1} parent=39 // pred_check
        %p228 = pneg %p33
      $region42: #{tpu_custom_call.1} parent=39 // pred_check_branch
        %230 = sbr.rel (%p228) target = $region44
      $region43: #{tpu_custom_call.1} parent=39 // pred_region
        %s231 = smul.u32 16, %s13
        %p232 = scmp.lt.s32.totalorder %s231, 31
        %s233 = scalar_select %p232, %s231, 31
        %s234 = smul.addr %s233, 7
        %s235 = smul.addr %s234, 8
        %s236 = scalar_lea.vmem %s0, %s235
        %s237 = smul.u32 16, %s13
      $region44: #{tpu_custom_call.1} parent=39 // pred_fallthru
        _
    $region40: #{tpu_custom_call.1} parent=5 // pred_fallthru
      _
    %p238 = scmp.le.s32.totalorder 1, %s13
    %p239 = scmp.lt.s32.totalorder %s13, 3
    %p240 = pnand %p238, %p239
    %p241 = pneg %p240
    // Predicated region
    $region45: #{tpu_custom_call.1} parent=5 // pred_check
      _
    $region46: #{tpu_custom_call.1} parent=5 // pred_check_branch
      %243 = sbr.rel (%p240) target = $region48
    $region47: #{tpu_custom_call.1} parent=5 // pred_region
      %s244 = ssub.s32 %s13, 1
      %s245 = smul.u32 16, %s18
      %p246 = scmp.lt.s32.totalorder %s245, 31
      %s247 = scalar_select %p246, %s245, 31
      %s248 = smul.addr %s247, 7
      %s249 = smul.addr %s248, 8
      %s250 = scalar_lea.vmem %s0, %s249
      %p251 = pneg %p39
      %p252 = pneg %p36
      %p253 = pneg %p60
      %p254 = pneg %p57
      %p255 = pneg %p81
      %p256 = pneg %p78
      %p257 = pneg %p102
      %p258 = pneg %p99
      %p259 = pneg %p123
      %p260 = pneg %p120
      %p261 = pneg %p144
      %p262 = pneg %p141
      %p263 = pneg %p165
      %p264 = pneg %p162
      %p265 = pneg %p191
      %p266 = pneg %p188
      %s267 = smul.u32 16, %s18
      %p268 = scmp.lt.s32.totalorder %s267, 31
      %s269 = scalar_select %p268, %s267, 31
      %s270 = smul.addr %s269, 8
      %s271 = scalar_lea.vmem %s7, %s270
      %s272 = smul.u32 16, %s18
      %p273 = scmp.lt.s32.totalorder %s272, 31
      %s274 = scalar_select %p273, %s272, 31
      %s275 = smul.addr %s274, 7
      %s276 = smul.addr %s275, 8
      %s277 = scalar_lea.vmem %s0, %s276
      %s278 = smul.u32 16, %s18
      %s279 = smul.u32 16, %s18
      %p280 = scmp.lt.s32.totalorder %s279, 31
      %s281 = scalar_select %p280, %s279, 31
      %s282 = smul.addr %s281, 8
      %s283 = scalar_lea.vmem %s7, %s282
      %s284 = smul.u32 16, %s18
      %v285 = vld [vmem:[%s277] sm:$0xff]
      %v286 = vld [vmem:[%s277 + $0x8] sm:$0xff]
      %v287 = vld [vmem:[%s277 + $0x10] sm:$0xff]
      %v288 = vld [vmem:[%s277 + $0x18] sm:$0xff]
      %v289 = vld [vmem:[%s277 + $0x20] sm:$0xff]
      %v290 = vld [vmem:[%s277 + $0x28] sm:$0xff]
      %v291 = vld [vmem:[%s277 + $0x30] sm:$0xff]
      %v292 = vld [vmem:[%s277 + $0x38] sm:$0xff]
      %v293 = vld [vmem:[%s277 + $0x40] sm:$0xff]
      %v294 = vld [vmem:[%s277 + $0x48] sm:$0xff]
      %v295 = vld [vmem:[%s277 + $0x50] sm:$0xff]
      %v296 = vld [vmem:[%s277 + $0x58] sm:$0xff]
      %v297 = vld [vmem:[%s277 + $0x60] sm:$0xff]
      %v298 = vld [vmem:[%s277 + $0x68] sm:$0xff]
      %v299 = vld [vmem:[%s277 + $0x70] sm:$0xff]
      %v300 = vld [vmem:[%s277 + $0x78] sm:$0xff]
      %v301 = vld [vmem:[%s277 + $0x80] sm:$0xff]
      %v302 = vld [vmem:[%s277 + $0x88] sm:$0xff]
      %v303 = vld [vmem:[%s277 + $0x90] sm:$0xff]
      %v304 = vld [vmem:[%s277 + $0x98] sm:$0xff]
      %v305 = vld [vmem:[%s277 + $0xa0] sm:$0xff]
      %v306 = vld [vmem:[%s277 + $0xa8] sm:$0xff]
      %v307 = vld [vmem:[%s277 + $0xb0] sm:$0xff]
      %v308 = vld [vmem:[%s277 + $0xb8] sm:$0xff]
      %v309 = vld [vmem:[%s277 + $0xc0] sm:$0xff]
      %v310 = vld [vmem:[%s277 + $0xc8] sm:$0xff]
      %v311 = vld [vmem:[%s277 + $0xd0] sm:$0xff]
      %v312 = vld [vmem:[%s277 + $0xd8] sm:$0xff]
      %v313 = vld [vmem:[%s277 + $0xe0] sm:$0xff]
      %v314 = vld [vmem:[%s277 + $0xe8] sm:$0xff]
      %v315 = vld [vmem:[%s277 + $0xf0] sm:$0xff]
      %v316 = vld [vmem:[%s277 + $0xf8] sm:$0xff]
      %v317 = vld [vmem:[%s277 + $0x100] sm:$0xff]
      %v318 = vld [vmem:[%s277 + $0x108] sm:$0xff]
      %v319 = vld [vmem:[%s277 + $0x110] sm:$0xff]
      %v320 = vld [vmem:[%s277 + $0x118] sm:$0xff]
      %v321 = vld [vmem:[%s277 + $0x120] sm:$0xff]
      %v322 = vld [vmem:[%s277 + $0x128] sm:$0xff]
      %v323 = vld [vmem:[%s277 + $0x130] sm:$0xff]
      %v324 = vld [vmem:[%s277 + $0x138] sm:$0xff]
      %v325 = vld [vmem:[%s277 + $0x140] sm:$0xff]
      %v326 = vld [vmem:[%s277 + $0x148] sm:$0xff]
      %v327 = vld [vmem:[%s277 + $0x150] sm:$0xff]
      %v328 = vld [vmem:[%s277 + $0x158] sm:$0xff]
      %v329 = vld [vmem:[%s277 + $0x160] sm:$0xff]
      %v330 = vld [vmem:[%s277 + $0x168] sm:$0xff]
      %v331 = vld [vmem:[%s277 + $0x170] sm:$0xff]
      %v332 = vld [vmem:[%s277 + $0x178] sm:$0xff]
      %v333 = vld [vmem:[%s277 + $0x180] sm:$0xff]
      %v334 = vld [vmem:[%s277 + $0x188] sm:$0xff]
      %v335 = vld [vmem:[%s277 + $0x190] sm:$0xff]
      %v336 = vld [vmem:[%s277 + $0x198] sm:$0xff]
      %v337 = vld [vmem:[%s277 + $0x1a0] sm:$0xff]
      %v338 = vld [vmem:[%s277 + $0x1a8] sm:$0xff]
      %v339 = vld [vmem:[%s277 + $0x1b0] sm:$0xff]
      %v340 = vld [vmem:[%s277 + $0x1b8] sm:$0xff]
      %v341 = vld [vmem:[%s277 + $0x1c0] sm:$0xff]
      %v342 = vld [vmem:[%s277 + $0x1c8] sm:$0xff]
      %v343 = vld [vmem:[%s277 + $0x1d0] sm:$0xff]
      %v344 = vld [vmem:[%s277 + $0x1d8] sm:$0xff]
      %v345 = vld [vmem:[%s277 + $0x1e0] sm:$0xff]
      %v346 = vld [vmem:[%s277 + $0x1e8] sm:$0xff]
      %v347 = vld [vmem:[%s277 + $0x1f0] sm:$0xff]
      %v348 = vld [vmem:[%s277 + $0x1f8] sm:$0xff]
      %v349 = vld [vmem:[%s277 + $0x200] sm:$0xff]
      %v350 = vld [vmem:[%s277 + $0x208] sm:$0xff]
      %v351 = vld [vmem:[%s277 + $0x210] sm:$0xff]
      %v352 = vld [vmem:[%s277 + $0x218] sm:$0xff]
      %v353 = vld [vmem:[%s277 + $0x220] sm:$0xff]
      %v354 = vld [vmem:[%s277 + $0x228] sm:$0xff]
      %v355 = vld [vmem:[%s277 + $0x230] sm:$0xff]
      %v356 = vld [vmem:[%s277 + $0x238] sm:$0xff]
      %v357 = vld [vmem:[%s277 + $0x240] sm:$0xff]
      %v358 = vld [vmem:[%s277 + $0x248] sm:$0xff]
      %v359 = vld [vmem:[%s277 + $0x250] sm:$0xff]
      %v360 = vld [vmem:[%s277 + $0x258] sm:$0xff]
      %v361 = vld [vmem:[%s277 + $0x260] sm:$0xff]
      %v362 = vld [vmem:[%s277 + $0x268] sm:$0xff]
      %v363 = vld [vmem:[%s277 + $0x270] sm:$0xff]
      %v364 = vld [vmem:[%s277 + $0x278] sm:$0xff]
      %v365 = vld [vmem:[%s277 + $0x280] sm:$0xff]
      %v366 = vld [vmem:[%s277 + $0x288] sm:$0xff]
      %v367 = vld [vmem:[%s277 + $0x290] sm:$0xff]
      %v368 = vld [vmem:[%s277 + $0x298] sm:$0xff]
      %v369 = vld [vmem:[%s277 + $0x2a0] sm:$0xff]
      %v370 = vld [vmem:[%s277 + $0x2a8] sm:$0xff]
      %v371 = vld [vmem:[%s277 + $0x2b0] sm:$0xff]
      %v372 = vld [vmem:[%s277 + $0x2b8] sm:$0xff]
      %v373 = vld [vmem:[%s277 + $0x2c0] sm:$0xff]
      %v374 = vld [vmem:[%s277 + $0x2c8] sm:$0xff]
      %v375 = vld [vmem:[%s277 + $0x2d0] sm:$0xff]
      %v376 = vld [vmem:[%s277 + $0x2d8] sm:$0xff]
      %v377 = vld [vmem:[%s277 + $0x2e0] sm:$0xff]
      %v378 = vld [vmem:[%s277 + $0x2e8] sm:$0xff]
      %v379 = vld [vmem:[%s277 + $0x2f0] sm:$0xff]
      %v380 = vld [vmem:[%s277 + $0x2f8] sm:$0xff]
      %v381 = vld [vmem:[%s277 + $0x300] sm:$0xff]
      %v382 = vld [vmem:[%s277 + $0x308] sm:$0xff]
      %v383 = vld [vmem:[%s277 + $0x310] sm:$0xff]
      %v384 = vld [vmem:[%s277 + $0x318] sm:$0xff]
      %v385 = vld [vmem:[%s277 + $0x320] sm:$0xff]
      %v386 = vld [vmem:[%s277 + $0x328] sm:$0xff]
      %v387 = vld [vmem:[%s277 + $0x330] sm:$0xff]
      %v388 = vld [vmem:[%s277 + $0x338] sm:$0xff]
      %v389 = vld [vmem:[%s277 + $0x340] sm:$0xff]
      %v390 = vld [vmem:[%s277 + $0x348] sm:$0xff]
      %v391 = vld [vmem:[%s277 + $0x350] sm:$0xff]
      %v392 = vld [vmem:[%s277 + $0x358] sm:$0xff]
      %v393 = vld [vmem:[%s277 + $0x360] sm:$0xff]
      %v394 = vld [vmem:[%s277 + $0x368] sm:$0xff]
      %v395 = vld [vmem:[%s277 + $0x370] sm:$0xff]
      %v396 = vld [vmem:[%s277 + $0x378] sm:$0xff]
      %v397 = vld [vmem:[%s1] sm:$0xff]
      %v398 = vld [vmem:[%s1 + $0x8] sm:$0xff]
      %v399 = vld [vmem:[%s1 + $0x10] sm:$0xff]
      %v400 = vld [vmem:[%s1 + $0x18] sm:$0xff]
      %v401 = vld [vmem:[%s1 + $0x20] sm:$0xff]
      %v402 = vld [vmem:[%s1 + $0x28] sm:$0xff]
      %v403 = vld [vmem:[%s1 + $0x30] sm:$0xff]
      %v404 = vld [vmem:[%s1 + $0x38] sm:$0xff]
      %v405 = vld [vmem:[%s1 + $0x40] sm:$0xff]
      %v406 = vld [vmem:[%s1 + $0x48] sm:$0xff]
      %v407 = vld [vmem:[%s1 + $0x50] sm:$0xff]
      %v408 = vld [vmem:[%s1 + $0x58] sm:$0xff]
      %v409 = vld [vmem:[%s1 + $0x60] sm:$0xff]
      %v410 = vld [vmem:[%s1 + $0x68] sm:$0xff]
      %v411 = vld [vmem:[%s1 + $0x70] sm:$0xff]
      %v412 = vld [vmem:[%s1 + $0x78] sm:$0xff]
      %v413 = vld [vmem:[%s1 + $0x80] sm:$0xff]
      %v414 = vld [vmem:[%s1 + $0x88] sm:$0xff]
      %v415 = vld [vmem:[%s1 + $0x90] sm:$0xff]
      %v416 = vld [vmem:[%s1 + $0x98] sm:$0xff]
      %v417 = vld [vmem:[%s1 + $0xa0] sm:$0xff]
      %v418 = vld [vmem:[%s1 + $0xa8] sm:$0xff]
      %v419 = vld [vmem:[%s1 + $0xb0] sm:$0xff]
      %v420 = vld [vmem:[%s1 + $0xb8] sm:$0xff]
      %v421 = vld [vmem:[%s1 + $0xc0] sm:$0xff]
      %v422 = vld [vmem:[%s1 + $0xc8] sm:$0xff]
      %v423 = vld [vmem:[%s1 + $0xd0] sm:$0xff]
      %v424 = vld [vmem:[%s1 + $0xd8] sm:$0xff]
      %v425 = vld [vmem:[%s1 + $0xe0] sm:$0xff]
      %v426 = vld [vmem:[%s1 + $0xe8] sm:$0xff]
      %v427 = vld [vmem:[%s1 + $0xf0] sm:$0xff]
      %v428 = vld [vmem:[%s1 + $0xf8] sm:$0xff]
      %v429 = vld [vmem:[%s1 + $0x100] sm:$0xff]
      %v430 = vld [vmem:[%s1 + $0x108] sm:$0xff]
      %v431 = vld [vmem:[%s1 + $0x110] sm:$0xff]
      %v432 = vld [vmem:[%s1 + $0x118] sm:$0xff]
      %v433 = vld [vmem:[%s1 + $0x120] sm:$0xff]
      %v434 = vld [vmem:[%s1 + $0x128] sm:$0xff]
      %v435 = vld [vmem:[%s1 + $0x130] sm:$0xff]
      %v436 = vld [vmem:[%s1 + $0x138] sm:$0xff]
      %v437 = vld [vmem:[%s1 + $0x140] sm:$0xff]
      %v438 = vld [vmem:[%s1 + $0x148] sm:$0xff]
      %v439 = vld [vmem:[%s1 + $0x150] sm:$0xff]
      %v440 = vld [vmem:[%s1 + $0x158] sm:$0xff]
      %v441 = vld [vmem:[%s1 + $0x160] sm:$0xff]
      %v442 = vld [vmem:[%s1 + $0x168] sm:$0xff]
      %v443 = vld [vmem:[%s1 + $0x170] sm:$0xff]
      %v444 = vld [vmem:[%s1 + $0x178] sm:$0xff]
      %v445 = vld [vmem:[%s1 + $0x180] sm:$0xff]
      %v446 = vld [vmem:[%s1 + $0x188] sm:$0xff]
      %v447 = vld [vmem:[%s1 + $0x190] sm:$0xff]
      %v448 = vld [vmem:[%s1 + $0x198] sm:$0xff]
      %v449 = vld [vmem:[%s1 + $0x1a0] sm:$0xff]
      %v450 = vld [vmem:[%s1 + $0x1a8] sm:$0xff]
      %v451 = vld [vmem:[%s1 + $0x1b0] sm:$0xff]
      %v452 = vld [vmem:[%s1 + $0x1b8] sm:$0xff]
      %v453 = vld [vmem:[%s1 + $0x1c0] sm:$0xff]
      %v454 = vld [vmem:[%s1 + $0x1c8] sm:$0xff]
      %v455 = vld [vmem:[%s1 + $0x1d0] sm:$0xff]
      %v456 = vld [vmem:[%s1 + $0x1d8] sm:$0xff]
      %v457 = vld [vmem:[%s1 + $0x1e0] sm:$0xff]
      %v458 = vld [vmem:[%s1 + $0x1e8] sm:$0xff]
      %v459 = vld [vmem:[%s1 + $0x1f0] sm:$0xff]
      %v460 = vld [vmem:[%s1 + $0x1f8] sm:$0xff]
      %v461 = vld [vmem:[%s1 + $0x200] sm:$0xff]
      %v462 = vld [vmem:[%s1 + $0x208] sm:$0xff]
      %v463 = vld [vmem:[%s1 + $0x210] sm:$0xff]
      %v464 = vld [vmem:[%s1 + $0x218] sm:$0xff]
      %v465 = vld [vmem:[%s1 + $0x220] sm:$0xff]
      %v466 = vld [vmem:[%s1 + $0x228] sm:$0xff]
      %v467 = vld [vmem:[%s1 + $0x230] sm:$0xff]
      %v468 = vld [vmem:[%s1 + $0x238] sm:$0xff]
      %v469 = vld [vmem:[%s1 + $0x240] sm:$0xff]
      %v470 = vld [vmem:[%s1 + $0x248] sm:$0xff]
      %v471 = vld [vmem:[%s1 + $0x250] sm:$0xff]
      %v472 = vld [vmem:[%s1 + $0x258] sm:$0xff]
      %v473 = vld [vmem:[%s1 + $0x260] sm:$0xff]
      %v474 = vld [vmem:[%s1 + $0x268] sm:$0xff]
      %v475 = vld [vmem:[%s1 + $0x270] sm:$0xff]
      %v476 = vld [vmem:[%s1 + $0x278] sm:$0xff]
      %v477 = vld [vmem:[%s1 + $0x280] sm:$0xff]
      %v478 = vld [vmem:[%s1 + $0x288] sm:$0xff]
      %v479 = vld [vmem:[%s1 + $0x290] sm:$0xff]
      %v480 = vld [vmem:[%s1 + $0x298] sm:$0xff]
      %v481 = vld [vmem:[%s1 + $0x2a0] sm:$0xff]
      %v482 = vld [vmem:[%s1 + $0x2a8] sm:$0xff]
      %v483 = vld [vmem:[%s1 + $0x2b0] sm:$0xff]
      %v484 = vld [vmem:[%s1 + $0x2b8] sm:$0xff]
      %v485 = vld [vmem:[%s1 + $0x2c0] sm:$0xff]
      %v486 = vld [vmem:[%s1 + $0x2c8] sm:$0xff]
      %v487 = vld [vmem:[%s1 + $0x2d0] sm:$0xff]
      %v488 = vld [vmem:[%s1 + $0x2d8] sm:$0xff]
      %v489 = vld [vmem:[%s1 + $0x2e0] sm:$0xff]
      %v490 = vld [vmem:[%s1 + $0x2e8] sm:$0xff]
      %v491 = vld [vmem:[%s1 + $0x2f0] sm:$0xff]
      %v492 = vld [vmem:[%s1 + $0x2f8] sm:$0xff]
      %v493 = vld [vmem:[%s1 + $0x300] sm:$0xff]
      %v494 = vld [vmem:[%s1 + $0x308] sm:$0xff]
      %v495 = vld [vmem:[%s1 + $0x310] sm:$0xff]
      %v496 = vld [vmem:[%s1 + $0x318] sm:$0xff]
      %v497 = vld [vmem:[%s1 + $0x320] sm:$0xff]
      %v498 = vld [vmem:[%s1 + $0x328] sm:$0xff]
      %v499 = vld [vmem:[%s1 + $0x330] sm:$0xff]
      %v500 = vld [vmem:[%s1 + $0x338] sm:$0xff]
      %v501 = vld [vmem:[%s1 + $0x340] sm:$0xff]
      %v502 = vld [vmem:[%s1 + $0x348] sm:$0xff]
      %v503 = vld [vmem:[%s1 + $0x350] sm:$0xff]
      %v504 = vld [vmem:[%s1 + $0x358] sm:$0xff]
      %v505 = vld [vmem:[%s1 + $0x360] sm:$0xff]
      %v506 = vld [vmem:[%s1 + $0x368] sm:$0xff]
      %v507 = vld [vmem:[%s1 + $0x370] sm:$0xff]
      %v508 = vld [vmem:[%s1 + $0x378] sm:$0xff]
      %v509 = vld [vmem:[%s1 + $0x380] sm:$0xff]
      %v510 = vld [vmem:[%s1 + $0x388] sm:$0xff]
      %v511 = vld [vmem:[%s1 + $0x390] sm:$0xff]
      %v512 = vld [vmem:[%s1 + $0x398] sm:$0xff]
      %v513 = vld [vmem:[%s1 + $0x3a0] sm:$0xff]
      %v514 = vld [vmem:[%s1 + $0x3a8] sm:$0xff]
      %v515 = vld [vmem:[%s1 + $0x3b0] sm:$0xff]
      %v516 = vld [vmem:[%s1 + $0x3b8] sm:$0xff]
      %v517 = vld [vmem:[%s1 + $0x3c0] sm:$0xff]
      %v518 = vld [vmem:[%s1 + $0x3c8] sm:$0xff]
      %v519 = vld [vmem:[%s1 + $0x3d0] sm:$0xff]
      %v520 = vld [vmem:[%s1 + $0x3d8] sm:$0xff]
      %v521 = vld [vmem:[%s1 + $0x3e0] sm:$0xff]
      %v522 = vld [vmem:[%s1 + $0x3e8] sm:$0xff]
      %v523 = vld [vmem:[%s1 + $0x3f0] sm:$0xff]
      %v524 = vld [vmem:[%s1 + $0x3f8] sm:$0xff]
      %v525 = vld [vmem:[%s1 + $0x400] sm:$0xff]
      %v526 = vld [vmem:[%s1 + $0x408] sm:$0xff]
      %v527 = vld [vmem:[%s1 + $0x410] sm:$0xff]
      %v528 = vld [vmem:[%s1 + $0x418] sm:$0xff]
      %v529 = vld [vmem:[%s1 + $0x420] sm:$0xff]
      %v530 = vld [vmem:[%s1 + $0x428] sm:$0xff]
      %v531 = vld [vmem:[%s1 + $0x430] sm:$0xff]
      %v532 = vld [vmem:[%s1 + $0x438] sm:$0xff]
      %v533 = vld [vmem:[%s1 + $0x440] sm:$0xff]
      %v534 = vld [vmem:[%s1 + $0x448] sm:$0xff]
      %v535 = vld [vmem:[%s1 + $0x450] sm:$0xff]
      %v536 = vld [vmem:[%s1 + $0x458] sm:$0xff]
      %v537 = vld [vmem:[%s1 + $0x460] sm:$0xff]
      %v538 = vld [vmem:[%s1 + $0x468] sm:$0xff]
      %v539 = vld [vmem:[%s1 + $0x470] sm:$0xff]
      %v540 = vld [vmem:[%s1 + $0x478] sm:$0xff]
      %v541 = vld [vmem:[%s1 + $0x480] sm:$0xff]
      %v542 = vld [vmem:[%s1 + $0x488] sm:$0xff]
      %v543 = vld [vmem:[%s1 + $0x490] sm:$0xff]
      %v544 = vld [vmem:[%s1 + $0x498] sm:$0xff]
      %v545 = vld [vmem:[%s1 + $0x4a0] sm:$0xff]
      %v546 = vld [vmem:[%s1 + $0x4a8] sm:$0xff]
      %v547 = vld [vmem:[%s1 + $0x4b0] sm:$0xff]
      %v548 = vld [vmem:[%s1 + $0x4b8] sm:$0xff]
      %v549 = vld [vmem:[%s1 + $0x4c0] sm:$0xff]
      %v550 = vld [vmem:[%s1 + $0x4c8] sm:$0xff]
      %v551 = vld [vmem:[%s1 + $0x4d0] sm:$0xff]
      %v552 = vld [vmem:[%s1 + $0x4d8] sm:$0xff]
      %v553 = vld [vmem:[%s1 + $0x4e0] sm:$0xff]
      %v554 = vld [vmem:[%s1 + $0x4e8] sm:$0xff]
      %v555 = vld [vmem:[%s1 + $0x4f0] sm:$0xff]
      %v556 = vld [vmem:[%s1 + $0x4f8] sm:$0xff]
      %v557 = vld [vmem:[%s1 + $0x500] sm:$0xff]
      %v558 = vld [vmem:[%s1 + $0x508] sm:$0xff]
      %v559 = vld [vmem:[%s1 + $0x510] sm:$0xff]
      %v560 = vld [vmem:[%s1 + $0x518] sm:$0xff]
      %v561 = vld [vmem:[%s1 + $0x520] sm:$0xff]
      %v562 = vld [vmem:[%s1 + $0x528] sm:$0xff]
      %v563 = vld [vmem:[%s1 + $0x530] sm:$0xff]
      %v564 = vld [vmem:[%s1 + $0x538] sm:$0xff]
      %v565 = vld [vmem:[%s1 + $0x540] sm:$0xff]
      %v566 = vld [vmem:[%s1 + $0x548] sm:$0xff]
      %v567 = vld [vmem:[%s1 + $0x550] sm:$0xff]
      %v568 = vld [vmem:[%s1 + $0x558] sm:$0xff]
      %v569 = vld [vmem:[%s1 + $0x560] sm:$0xff]
      %v570 = vld [vmem:[%s1 + $0x568] sm:$0xff]
      %v571 = vld [vmem:[%s1 + $0x570] sm:$0xff]
      %v572 = vld [vmem:[%s1 + $0x578] sm:$0xff]
      %v573 = vld [vmem:[%s1 + $0x580] sm:$0xff]
      %v574 = vld [vmem:[%s1 + $0x588] sm:$0xff]
      %v575 = vld [vmem:[%s1 + $0x590] sm:$0xff]
      %v576 = vld [vmem:[%s1 + $0x598] sm:$0xff]
      %v577 = vld [vmem:[%s1 + $0x5a0] sm:$0xff]
      %v578 = vld [vmem:[%s1 + $0x5a8] sm:$0xff]
      %v579 = vld [vmem:[%s1 + $0x5b0] sm:$0xff]
      %v580 = vld [vmem:[%s1 + $0x5b8] sm:$0xff]
      %v581 = vld [vmem:[%s1 + $0x5c0] sm:$0xff]
      %v582 = vld [vmem:[%s1 + $0x5c8] sm:$0xff]
      %v583 = vld [vmem:[%s1 + $0x5d0] sm:$0xff]
      %v584 = vld [vmem:[%s1 + $0x5d8] sm:$0xff]
      %v585 = vld [vmem:[%s1 + $0x5e0] sm:$0xff]
      %v586 = vld [vmem:[%s1 + $0x5e8] sm:$0xff]
      %v587 = vld [vmem:[%s1 + $0x5f0] sm:$0xff]
      %v588 = vld [vmem:[%s1 + $0x5f8] sm:$0xff]
      %v589 = vld [vmem:[%s1 + $0x600] sm:$0xff]
      %v590 = vld [vmem:[%s1 + $0x608] sm:$0xff]
      %v591 = vld [vmem:[%s1 + $0x610] sm:$0xff]
      %v592 = vld [vmem:[%s1 + $0x618] sm:$0xff]
      %v593 = vld [vmem:[%s2] sm:$0x3]
      %v595 = vlaneseq
      %v596 = vshrl.u32 %v595, 7
      %v597 = vsub.s32 0, %v596
      %v598 = vrot.slane %v593, %v597
      %v599 = vlaneseq
      %v600 = vshrl.u32 %v599, 7
      %v601 = vsub.s32 1, %v600
      %v602 = vrot.slane %v593, %v601
      %vm605 = vcmask 130048
      %v607 = vsel %vm605, %v291, 0
      %v610 = vsel %vm605, %v298, 0
      %v613 = vsel %vm605, %v305, 0
      %v616 = vsel %vm605, %v312, 0
      %v619 = vsel %vm605, %v319, 0
      %v622 = vsel %vm605, %v326, 0
      %v625 = vsel %vm605, %v333, 0
      %v628 = vsel %vm605, %v340, 0
      %v631 = vsel %vm605, %v347, 0
      %v634 = vsel %vm605, %v354, 0
      %v637 = vsel %vm605, %v361, 0
      %v640 = vsel %vm605, %v368, 0
      %v643 = vsel %vm605, %v375, 0
      %v646 = vsel %vm605, %v382, 0
      %v649 = vsel %vm605, %v389, 0
      %v652 = vsel %vm605, %v396, 0
      %654 = vmatprep.subr.mxu0 %v398
      %655 = vmatpush1.msra.mxu0 %v397
      %656 = vmatprep.subr.mxu0 %v400
      %657 = vmatpush1.msra.mxu0 %v399
      %658 = vmatprep.subr.mxu0 %v402
      %659 = vmatpush1.msra.mxu0 %v401
      %660 = vmatprep.subr.mxu0 %v404
      %661 = vmatpush1.msra.mxu0 %v403
      %662 = vmatprep.subr.mxu0 %v406
      %663 = vmatpush1.msra.mxu0 %v405
      %664 = vmatprep.subr.mxu0 %v408
      %665 = vmatpush1.msra.mxu0 %v407
      %666 = vmatprep.subr.mxu0 %v410
      %667 = vmatpush1.msra.mxu0 %v409
      %668 = vmatprep.subr.mxu0 %v412
      %669 = vmatpush1.msra.mxu0 %v411
      %670 = vmatprep.subr.mxu0 %v414
      %671 = vmatpush1.msra.mxu0 %v413
      %672 = vmatprep.subr.mxu0 %v416
      %673 = vmatpush1.msra.mxu0 %v415
      %674 = vmatprep.subr.mxu0 %v418
      %675 = vmatpush1.msra.mxu0 %v417
      %676 = vmatprep.subr.mxu0 %v420
      %677 = vmatpush1.msra.mxu0 %v419
      %678 = vmatprep.subr.mxu0 %v422
      %679 = vmatpush1.msra.mxu0 %v421
      %680 = vmatprep.subr.mxu0 %v424
      %681 = vmatpush1.msra.mxu0 %v423
      %682 = vmatprep.subr.mxu0 %v426
      %683 = vmatpush1.msra.mxu0 %v425
      %684 = vmatprep.subr.mxu0 %v428
      %685 = vmatpush1.msra.mxu0 %v427
      %686 = vmatprep.subr.mxu0 %v430
      %687 = vmatpush1.msra.mxu0 %v429
      %688 = vmatprep.subr.mxu0 %v432
      %689 = vmatpush1.msra.mxu0 %v431
      %690 = vmatprep.subr.mxu0 %v434
      %691 = vmatpush1.msra.mxu0 %v433
      %692 = vmatprep.subr.mxu0 %v436
      %693 = vmatpush1.msra.mxu0 %v435
      %694 = vmatprep.subr.mxu0 %v438
      %695 = vmatpush1.msra.mxu0 %v437
      %696 = vmatprep.subr.mxu0 %v440
      %697 = vmatpush1.msra.mxu0 %v439
      %698 = vmatprep.subr.mxu0 %v442
      %699 = vmatpush1.msra.mxu0 %v441
      %700 = vmatprep.subr.mxu0 %v444
      %701 = vmatpush1.msra.mxu0 %v443
      %702 = vmatprep.subr.mxu0 %v446
      %703 = vmatpush1.msra.mxu0 %v445
      %704 = vmatprep.subr.mxu0 %v448
      %705 = vmatpush1.msra.mxu0 %v447
      %706 = vmatprep.subr.mxu0 %v450
      %707 = vmatpush1.msra.mxu0 %v449
      %708 = vmatprep.subr.mxu0 %v452
      %709 = vmatpush1.msra.mxu0 %v451
      %710 = vmatprep.subr.mxu0 %v454
      %711 = vmatpush1.msra.mxu0 %v453
      %712 = vmatprep.subr.mxu0 %v456
      %713 = vmatpush1.msra.mxu0 %v455
      %714 = vmatprep.subr.mxu0 %v458
      %715 = vmatpush1.msra.mxu0 %v457
      %716 = vmatprep.subr.mxu0 %v460
      %717 = vmatpush1.msra.mxu0 %v459
      %718 = vmatprep.mubr.f32.mxu0 %v286
      %719 = vmatmul.mubr.f32.gmra.mrb[0].mxu0 %v285
      %v720 = vpop.f32.mrb[0].mxu0
      %v721 = vadd.f32 %v598, %v720
      %v722 = vpop.f32.mrb[0].mxu0
      %v723 = vadd.f32 %v602, %v722
      %724 = vmatprep.mubr.f32.mxu0 %v293
      %725 = vmatmul.mubr.f32.gmra.mrb[0].mxu0 %v292
      %v726 = vpop.f32.mrb[0].mxu0
      %v727 = vadd.f32 %v598, %v726
      %v728 = vpop.f32.mrb[0].mxu0
      %v729 = vadd.f32 %v602, %v728
      %730 = vmatprep.mubr.f32.mxu0 %v300
      %731 = vmatmul.mubr.f32.gmra.mrb[0].mxu0 %v299
      %v732 = vpop.f32.mrb[0].mxu0
      %v733 = vadd.f32 %v598, %v732
      %v734 = vpop.f32.mrb[0].mxu0
      %v735 = vadd.f32 %v602, %v734
      %736 = vmatprep.mubr.f32.mxu0 %v307
      %737 = vmatmul.mubr.f32.gmra.mrb[0].mxu0 %v306
      %v738 = vpop.f32.mrb[0].mxu0
      %v739 = vadd.f32 %v598, %v738
      %v740 = vpop.f32.mrb[0].mxu0
      %v741 = vadd.f32 %v602, %v740
      %742 = vmatprep.mubr.f32.mxu0 %v314
      %743 = vmatmul.mubr.f32.gmra.mrb[0].mxu0 %v313
      %v744 = vpop.f32.mrb[0].mxu0
      %v745 = vadd.f32 %v598, %v744
      %v746 = vpop.f32.mrb[0].mxu0
      %v747 = vadd.f32 %v602, %v746
      %748 = vmatprep.mubr.f32.mxu0 %v321
      %749 = vmatmul.mubr.f32.gmra.mrb[0].mxu0 %v320
      %v750 = vpop.f32.mrb[0].mxu0
      %v751 = vadd.f32 %v598, %v750
      %v752 = vpop.f32.mrb[0].mxu0
      %v753 = vadd.f32 %v602, %v752
      %754 = vmatprep.mubr.f32.mxu0 %v328
      %755 = vmatmul.mubr.f32.gmra.mrb[0].mxu0 %v327
      %v756 = vpop.f32.mrb[0].mxu0
      %v757 = vadd.f32 %v598, %v756
      %v758 = vpop.f32.mrb[0].mxu0
      %v759 = vadd.f32 %v602, %v758
      %760 = vmatprep.mubr.f32.mxu0 %v335
      %761 = vmatmul.mubr.f32.gmra.mrb[0].mxu0 %v334
      %v762 = vpop.f32.mrb[0].mxu0
      %v763 = vadd.f32 %v598, %v762
      %v764 = vpop.f32.mrb[0].mxu0
      %v765 = vadd.f32 %v602, %v764
      %766 = vmatprep.mubr.f32.mxu0 %v342
      %767 = vmatmul.mubr.f32.gmra.mrb[0].mxu0 %v341
      %v768 = vpop.f32.mrb[0].mxu0
      %v769 = vadd.f32 %v598, %v768
      %v770 = vpop.f32.mrb[0].mxu0
      %v771 = vadd.f32 %v602, %v770
      %772 = vmatprep.mubr.f32.mxu0 %v349
      %773 = vmatmul.mubr.f32.gmra.mrb[0].mxu0 %v348
      %v774 = vpop.f32.mrb[0].mxu0
      %v775 = vadd.f32 %v598, %v774
      %v776 = vpop.f32.mrb[0].mxu0
      %v777 = vadd.f32 %v602, %v776
      %778 = vmatprep.mubr.f32.mxu0 %v356
      %779 = vmatmul.mubr.f32.gmra.mrb[0].mxu0 %v355
      %v780 = vpop.f32.mrb[0].mxu0
      %v781 = vadd.f32 %v598, %v780
      %v782 = vpop.f32.mrb[0].mxu0
      %v783 = vadd.f32 %v602, %v782
      %784 = vmatprep.mubr.f32.mxu0 %v363
      %785 = vmatmul.mubr.f32.gmra.mrb[0].mxu0 %v362
      %v786 = vpop.f32.mrb[0].mxu0
      %v787 = vadd.f32 %v598, %v786
      %v788 = vpop.f32.mrb[0].mxu0
      %v789 = vadd.f32 %v602, %v788
      %790 = vmatprep.mubr.f32.mxu0 %v370
      %791 = vmatmul.mubr.f32.gmra.mrb[0].mxu0 %v369
      %v792 = vpop.f32.mrb[0].mxu0
      %v793 = vadd.f32 %v598, %v792
      %v794 = vpop.f32.mrb[0].mxu0
      %v795 = vadd.f32 %v602, %v794
      %796 = vmatprep.mubr.f32.mxu0 %v377
      %797 = vmatmul.mubr.f32.gmra.mrb[0].mxu0 %v376
      %v798 = vpop.f32.mrb[0].mxu0
      %v799 = vadd.f32 %v598, %v798
      %v800 = vpop.f32.mrb[0].mxu0
      %v801 = vadd.f32 %v602, %v800
      %802 = vmatprep.mubr.f32.mxu0 %v384
      %803 = vmatmul.mubr.f32.gmra.mrb[0].mxu0 %v383
      %v804 = vpop.f32.mrb[0].mxu0
      %v805 = vadd.f32 %v598, %v804
      %v806 = vpop.f32.mrb[0].mxu0
      %v807 = vadd.f32 %v602, %v806
      %808 = vmatprep.mubr.f32.mxu0 %v391
      %809 = vmatmul.mubr.f32.gmra.mrb[0].mxu0 %v390
      %v810 = vpop.f32.mrb[0].mxu0
      %v811 = vadd.f32 %v598, %v810
      %v812 = vpop.f32.mrb[0].mxu0
      %v813 = vadd.f32 %v602, %v812
      %814 = vdwg.mxu0
      %815 = vmatprep.subr.mxu0 %v462
      %816 = vmatpush1.msra.mxu0 %v461
      %817 = vmatprep.subr.mxu0 %v464
      %818 = vmatpush1.msra.mxu0 %v463
      %819 = vmatprep.subr.mxu0 %v466
      %820 = vmatpush1.msra.mxu0 %v465
      %821 = vmatprep.subr.mxu0 %v468
      %822 = vmatpush1.msra.mxu0 %v467
      %823 = vmatprep.subr.mxu0 %v470
      %824 = vmatpush1.msra.mxu0 %v469
      %825 = vmatprep.subr.mxu0 %v472
      %826 = vmatpush1.msra.mxu0 %v471
      %827 = vmatprep.subr.mxu0 %v474
      %828 = vmatpush1.msra.mxu0 %v473
      %829 = vmatprep.subr.mxu0 %v476
      %830 = vmatpush1.msra.mxu0 %v475
      %831 = vmatprep.subr.mxu0 %v478
      %832 = vmatpush1.msra.mxu0 %v477
      %833 = vmatprep.subr.mxu0 %v480
      %834 = vmatpush1.msra.mxu0 %v479
      %835 = vmatprep.subr.mxu0 %v482
      %836 = vmatpush1.msra.mxu0 %v481
      %837 = vmatprep.subr.mxu0 %v484
      %838 = vmatpush1.msra.mxu0 %v483
      %839 = vmatprep.subr.mxu0 %v486
      %840 = vmatpush1.msra.mxu0 %v485
      %841 = vmatprep.subr.mxu0 %v488
      %842 = vmatpush1.msra.mxu0 %v487
      %843 = vmatprep.subr.mxu0 %v490
      %844 = vmatpush1.msra.mxu0 %v489
      %845 = vmatprep.subr.mxu0 %v492
      %846 = vmatpush1.msra.mxu0 %v491
      %847 = vmatprep.subr.mxu0 %v494
      %848 = vmatpush1.msra.mxu0 %v493
      %849 = vmatprep.subr.mxu0 %v496
      %850 = vmatpush1.msra.mxu0 %v495
      %851 = vmatprep.subr.mxu0 %v498
      %852 = vmatpush1.msra.mxu0 %v497
      %853 = vmatprep.subr.mxu0 %v500
      %854 = vmatpush1.msra.mxu0 %v499
      %855 = vmatprep.subr.mxu0 %v502
      %856 = vmatpush1.msra.mxu0 %v501
      %857 = vmatprep.subr.mxu0 %v504
      %858 = vmatpush1.msra.mxu0 %v503
      %859 = vmatprep.subr.mxu0 %v506
      %860 = vmatpush1.msra.mxu0 %v505
      %861 = vmatprep.subr.mxu0 %v508
      %862 = vmatpush1.msra.mxu0 %v507
      %863 = vmatprep.subr.mxu0 %v510
      %864 = vmatpush1.msra.mxu0 %v509
      %865 = vmatprep.subr.mxu0 %v512
      %866 = vmatpush1.msra.mxu0 %v511
      %867 = vmatprep.subr.mxu0 %v514
      %868 = vmatpush1.msra.mxu0 %v513
      %869 = vmatprep.subr.mxu0 %v516
      %870 = vmatpush1.msra.mxu0 %v515
      %871 = vmatprep.subr.mxu0 %v518
      %872 = vmatpush1.msra.mxu0 %v517
      %873 = vmatprep.subr.mxu0 %v520
      %874 = vmatpush1.msra.mxu0 %v519
      %875 = vmatprep.subr.mxu0 %v522
      %876 = vmatpush1.msra.mxu0 %v521
      %877 = vmatprep.subr.mxu0 %v524
      %878 = vmatpush1.msra.mxu0 %v523
      %879 = vmatprep.mubr.f32.mxu0 %v288
      %880 = vmatmul.mubr.f32.gmra.mrb[0].mxu0 %v287
      %v881 = vpop.f32.mrb[0].mxu0
      %v882 = vadd.f32 %v721, %v881
      %v883 = vpop.f32.mrb[0].mxu0
      %v884 = vadd.f32 %v723, %v883
      %885 = vmatprep.mubr.f32.mxu0 %v295
      %886 = vmatmul.mubr.f32.gmra.mrb[0].mxu0 %v294
      %v887 = vpop.f32.mrb[0].mxu0
      %v888 = vadd.f32 %v727, %v887
      %v889 = vpop.f32.mrb[0].mxu0
      %v890 = vadd.f32 %v729, %v889
      %891 = vmatprep.mubr.f32.mxu0 %v302
      %892 = vmatmul.mubr.f32.gmra.mrb[0].mxu0 %v301
      %v893 = vpop.f32.mrb[0].mxu0
      %v894 = vadd.f32 %v733, %v893
      %v895 = vpop.f32.mrb[0].mxu0
      %v896 = vadd.f32 %v735, %v895
      %897 = vmatprep.mubr.f32.mxu0 %v309
      %898 = vmatmul.mubr.f32.gmra.mrb[0].mxu0 %v308
      %v899 = vpop.f32.mrb[0].mxu0
      %v900 = vadd.f32 %v739, %v899
      %v901 = vpop.f32.mrb[0].mxu0
      %v902 = vadd.f32 %v741, %v901
      %903 = vmatprep.mubr.f32.mxu0 %v316
      %904 = vmatmul.mubr.f32.gmra.mrb[0].mxu0 %v315
      %v905 = vpop.f32.mrb[0].mxu0
      %v906 = vadd.f32 %v745, %v905
      %v907 = vpop.f32.mrb[0].mxu0
      %v908 = vadd.f32 %v747, %v907
      %909 = vmatprep.mubr.f32.mxu0 %v323
      %910 = vmatmul.mubr.f32.gmra.mrb[0].mxu0 %v322
      %v911 = vpop.f32.mrb[0].mxu0
      %v912 = vadd.f32 %v751, %v911
      %v913 = vpop.f32.mrb[0].mxu0
      %v914 = vadd.f32 %v753, %v913
      %915 = vmatprep.mubr.f32.mxu0 %v330
      %916 = vmatmul.mubr.f32.gmra.mrb[0].mxu0 %v329
      %v917 = vpop.f32.mrb[0].mxu0
      %v918 = vadd.f32 %v757, %v917
      %v919 = vpop.f32.mrb[0].mxu0
      %v920 = vadd.f32 %v759, %v919
      %921 = vmatprep.mubr.f32.mxu0 %v337
      %922 = vmatmul.mubr.f32.gmra.mrb[0].mxu0 %v336
      %v923 = vpop.f32.mrb[0].mxu0
      %v924 = vadd.f32 %v763, %v923
      %v925 = vpop.f32.mrb[0].mxu0
      %v926 = vadd.f32 %v765, %v925
      %927 = vmatprep.mubr.f32.mxu0 %v344
      %928 = vmatmul.mubr.f32.gmra.mrb[0].mxu0 %v343
      %v929 = vpop.f32.mrb[0].mxu0
      %v930 = vadd.f32 %v769, %v929
      %v931 = vpop.f32.mrb[0].mxu0
      %v932 = vadd.f32 %v771, %v931
      %933 = vmatprep.mubr.f32.mxu0 %v351
      %934 = vmatmul.mubr.f32.gmra.mrb[0].mxu0 %v350
      %v935 = vpop.f32.mrb[0].mxu0
      %v936 = vadd.f32 %v775, %v935
      %v937 = vpop.f32.mrb[0].mxu0
      %v938 = vadd.f32 %v777, %v937
      %939 = vmatprep.mubr.f32.mxu0 %v358
      %940 = vmatmul.mubr.f32.gmra.mrb[0].mxu0 %v357
      %v941 = vpop.f32.mrb[0].mxu0
      %v942 = vadd.f32 %v781, %v941
      %v943 = vpop.f32.mrb[0].mxu0
      %v944 = vadd.f32 %v783, %v943
      %945 = vmatprep.mubr.f32.mxu0 %v365
      %946 = vmatmul.mubr.f32.gmra.mrb[0].mxu0 %v364
      %v947 = vpop.f32.mrb[0].mxu0
      %v948 = vadd.f32 %v787, %v947
      %v949 = vpop.f32.mrb[0].mxu0
      %v950 = vadd.f32 %v789, %v949
      %951 = vmatprep.mubr.f32.mxu0 %v372
      %952 = vmatmul.mubr.f32.gmra.mrb[0].mxu0 %v371
      %v953 = vpop.f32.mrb[0].mxu0
      %v954 = vadd.f32 %v793, %v953
      %v955 = vpop.f32.mrb[0].mxu0
      %v956 = vadd.f32 %v795, %v955
      %957 = vmatprep.mubr.f32.mxu0 %v379
      %958 = vmatmul.mubr.f32.gmra.mrb[0].mxu0 %v378
      %v959 = vpop.f32.mrb[0].mxu0
      %v960 = vadd.f32 %v799, %v959
      %v961 = vpop.f32.mrb[0].mxu0
      %v962 = vadd.f32 %v801, %v961
      %963 = vmatprep.mubr.f32.mxu0 %v386
      %964 = vmatmul.mubr.f32.gmra.mrb[0].mxu0 %v385
      %v965 = vpop.f32.mrb[0].mxu0
      %v966 = vadd.f32 %v805, %v965
      %v967 = vpop.f32.mrb[0].mxu0
      %v968 = vadd.f32 %v807, %v967
      %969 = vmatprep.mubr.f32.mxu0 %v393
      %970 = vmatmul.mubr.f32.gmra.mrb[0].mxu0 %v392
      %v971 = vpop.f32.mrb[0].mxu0
      %v972 = vadd.f32 %v811, %v971
      %v973 = vpop.f32.mrb[0].mxu0
      %v974 = vadd.f32 %v813, %v973
      %975 = vdwg.mxu0
      %976 = vmatprep.subr.mxu0 %v526
      %977 = vmatpush1.msra.mxu0 %v525
      %978 = vmatprep.subr.mxu0 %v528
      %979 = vmatpush1.msra.mxu0 %v527
      %980 = vmatprep.subr.mxu0 %v530
      %981 = vmatpush1.msra.mxu0 %v529
      %982 = vmatprep.subr.mxu0 %v532
      %983 = vmatpush1.msra.mxu0 %v531
      %984 = vmatprep.subr.mxu0 %v534
      %985 = vmatpush1.msra.mxu0 %v533
      %986 = vmatprep.subr.mxu0 %v536
      %987 = vmatpush1.msra.mxu0 %v535
      %988 = vmatprep.subr.mxu0 %v538
      %989 = vmatpush1.msra.mxu0 %v537
      %990 = vmatprep.subr.mxu0 %v540
      %991 = vmatpush1.msra.mxu0 %v539
      %992 = vmatprep.subr.mxu0 %v542
      %993 = vmatpush1.msra.mxu0 %v541
      %994 = vmatprep.subr.mxu0 %v544
      %995 = vmatpush1.msra.mxu0 %v543
      %996 = vmatprep.subr.mxu0 %v546
      %997 = vmatpush1.msra.mxu0 %v545
      %998 = vmatprep.subr.mxu0 %v548
      %999 = vmatpush1.msra.mxu0 %v547
      %1000 = vmatprep.subr.mxu0 %v550
      %1001 = vmatpush1.msra.mxu0 %v549
      %1002 = vmatprep.subr.mxu0 %v552
      %1003 = vmatpush1.msra.mxu0 %v551
      %1004 = vmatprep.subr.mxu0 %v554
      %1005 = vmatpush1.msra.mxu0 %v553
      %1006 = vmatprep.subr.mxu0 %v556
      %1007 = vmatpush1.msra.mxu0 %v555
      %1008 = vmatprep.subr.mxu0 %v558
      %1009 = vmatpush1.msra.mxu0 %v557
      %1010 = vmatprep.subr.mxu0 %v560
      %1011 = vmatpush1.msra.mxu0 %v559
      %1012 = vmatprep.subr.mxu0 %v562
      %1013 = vmatpush1.msra.mxu0 %v561
      %1014 = vmatprep.subr.mxu0 %v564
      %1015 = vmatpush1.msra.mxu0 %v563
      %1016 = vmatprep.subr.mxu0 %v566
      %1017 = vmatpush1.msra.mxu0 %v565
      %1018 = vmatprep.subr.mxu0 %v568
      %1019 = vmatpush1.msra.mxu0 %v567
      %1020 = vmatprep.subr.mxu0 %v570
      %1021 = vmatpush1.msra.mxu0 %v569
      %1022 = vmatprep.subr.mxu0 %v572
      %1023 = vmatpush1.msra.mxu0 %v571
      %1024 = vmatprep.subr.mxu0 %v574
      %1025 = vmatpush1.msra.mxu0 %v573
      %1026 = vmatprep.subr.mxu0 %v576
      %1027 = vmatpush1.msra.mxu0 %v575
      %1028 = vmatprep.subr.mxu0 %v578
      %1029 = vmatpush1.msra.mxu0 %v577
      %1030 = vmatprep.subr.mxu0 %v580
      %1031 = vmatpush1.msra.mxu0 %v579
      %1032 = vmatprep.subr.mxu0 %v582
      %1033 = vmatpush1.msra.mxu0 %v581
      %1034 = vmatprep.subr.mxu0 %v584
      %1035 = vmatpush1.msra.mxu0 %v583
      %1036 = vmatprep.subr.mxu0 %v586
      %1037 = vmatpush1.msra.mxu0 %v585
      %1038 = vmatprep.subr.mxu0 %v588
      %1039 = vmatpush1.msra.mxu0 %v587
      %1040 = vmatprep.mubr.f32.mxu0 %v290
      %1041 = vmatmul.mubr.f32.gmra.mrb[0].mxu0 %v289
      %v1042 = vpop.f32.mrb[0].mxu0
      %v1043 = vadd.f32 %v882, %v1042
      %v1044 = vpop.f32.mrb[0].mxu0
      %v1045 = vadd.f32 %v884, %v1044
      %1046 = vmatprep.mubr.f32.mxu0 %v297
      %1047 = vmatmul.mubr.f32.gmra.mrb[0].mxu0 %v296
      %v1048 = vpop.f32.mrb[0].mxu0
      %v1049 = vadd.f32 %v888, %v1048
      %v1050 = vpop.f32.mrb[0].mxu0
      %v1051 = vadd.f32 %v890, %v1050
      %1052 = vmatprep.mubr.f32.mxu0 %v304
      %1053 = vmatmul.mubr.f32.gmra.mrb[0].mxu0 %v303
      %v1054 = vpop.f32.mrb[0].mxu0
      %v1055 = vadd.f32 %v894, %v1054
      %v1056 = vpop.f32.mrb[0].mxu0
      %v1057 = vadd.f32 %v896, %v1056
      %1058 = vmatprep.mubr.f32.mxu0 %v311
      %1059 = vmatmul.mubr.f32.gmra.mrb[0].mxu0 %v310
      %v1060 = vpop.f32.mrb[0].mxu0
      %v1061 = vadd.f32 %v900, %v1060
      %v1062 = vpop.f32.mrb[0].mxu0
      %v1063 = vadd.f32 %v902, %v1062
      %1064 = vmatprep.mubr.f32.mxu0 %v318
      %1065 = vmatmul.mubr.f32.gmra.mrb[0].mxu0 %v317
      %v1066 = vpop.f32.mrb[0].mxu0
      %v1067 = vadd.f32 %v906, %v1066
      %v1068 = vpop.f32.mrb[0].mxu0
      %v1069 = vadd.f32 %v908, %v1068
      %1070 = vmatprep.mubr.f32.mxu0 %v325
      %1071 = vmatmul.mubr.f32.gmra.mrb[0].mxu0 %v324
      %v1072 = vpop.f32.mrb[0].mxu0
      %v1073 = vadd.f32 %v912, %v1072
      %v1074 = vpop.f32.mrb[0].mxu0
      %v1075 = vadd.f32 %v914, %v1074
      %1076 = vmatprep.mubr.f32.mxu0 %v332
      %1077 = vmatmul.mubr.f32.gmra.mrb[0].mxu0 %v331
      %v1078 = vpop.f32.mrb[0].mxu0
      %v1079 = vadd.f32 %v918, %v1078
      %v1080 = vpop.f32.mrb[0].mxu0
      %v1081 = vadd.f32 %v920, %v1080
      %1082 = vmatprep.mubr.f32.mxu0 %v339
      %1083 = vmatmul.mubr.f32.gmra.mrb[0].mxu0 %v338
      %v1084 = vpop.f32.mrb[0].mxu0
      %v1085 = vadd.f32 %v924, %v1084
      %v1086 = vpop.f32.mrb[0].mxu0
      %v1087 = vadd.f32 %v926, %v1086
      %1088 = vmatprep.mubr.f32.mxu0 %v346
      %1089 = vmatmul.mubr.f32.gmra.mrb[0].mxu0 %v345
      %v1090 = vpop.f32.mrb[0].mxu0
      %v1091 = vadd.f32 %v930, %v1090
      %v1092 = vpop.f32.mrb[0].mxu0
      %v1093 = vadd.f32 %v932, %v1092
      %1094 = vmatprep.mubr.f32.mxu0 %v353
      %1095 = vmatmul.mubr.f32.gmra.mrb[0].mxu0 %v352
      %v1096 = vpop.f32.mrb[0].mxu0
      %v1097 = vadd.f32 %v936, %v1096
      %v1098 = vpop.f32.mrb[0].mxu0
      %v1099 = vadd.f32 %v938, %v1098
      %1100 = vmatprep.mubr.f32.mxu0 %v360
      %1101 = vmatmul.mubr.f32.gmra.mrb[0].mxu0 %v359
      %v1102 = vpop.f32.mrb[0].mxu0
      %v1103 = vadd.f32 %v942, %v1102
      %v1104 = vpop.f32.mrb[0].mxu0
      %v1105 = vadd.f32 %v944, %v1104
      %1106 = vmatprep.mubr.f32.mxu0 %v367
      %1107 = vmatmul.mubr.f32.gmra.mrb[0].mxu0 %v366
      %v1108 = vpop.f32.mrb[0].mxu0
      %v1109 = vadd.f32 %v948, %v1108
      %v1110 = vpop.f32.mrb[0].mxu0
      %v1111 = vadd.f32 %v950, %v1110
      %1112 = vmatprep.mubr.f32.mxu0 %v374
      %1113 = vmatmul.mubr.f32.gmra.mrb[0].mxu0 %v373
      %v1114 = vpop.f32.mrb[0].mxu0
      %v1115 = vadd.f32 %v954, %v1114
      %v1116 = vpop.f32.mrb[0].mxu0
      %v1117 = vadd.f32 %v956, %v1116
      %1118 = vmatprep.mubr.f32.mxu0 %v381
      %1119 = vmatmul.mubr.f32.gmra.mrb[0].mxu0 %v380
      %v1120 = vpop.f32.mrb[0].mxu0
      %v1121 = vadd.f32 %v960, %v1120
      %v1122 = vpop.f32.mrb[0].mxu0
      %v1123 = vadd.f32 %v962, %v1122
      %1124 = vmatprep.mubr.f32.mxu0 %v388
      %1125 = vmatmul.mubr.f32.gmra.mrb[0].mxu0 %v387
      %v1126 = vpop.f32.mrb[0].mxu0
      %v1127 = vadd.f32 %v966, %v1126
      %v1128 = vpop.f32.mrb[0].mxu0
      %v1129 = vadd.f32 %v968, %v1128
      %1130 = vmatprep.mubr.f32.mxu0 %v395
      %1131 = vmatmul.mubr.f32.gmra.mrb[0].mxu0 %v394
      %v1132 = vpop.f32.mrb[0].mxu0
      %v1133 = vadd.f32 %v972, %v1132
      %v1134 = vpop.f32.mrb[0].mxu0
      %v1135 = vadd.f32 %v974, %v1134
      %1136 = vdwg.mxu0
      %1137 = vmatprep.subr.mxu0 %v590
      %1138 = vmatpush1.msra.mxu0 %v589
      %1139 = vmatprep.subr.mxu0 %v592
      %1140 = vmatpush1.msra.mxu0 %v591
      %1141 = vmatprep.subr.mxu0 0.0
      %1142 = vmatpush1.msra.mxu0 0.0
      %1143 = vmatprep.subr.mxu0 0.0
      %1144 = vmatpush1.msra.mxu0 0.0
      %1145 = vmatprep.subr.mxu0 0.0
      %1146 = vmatpush1.msra.mxu0 0.0
      %1147 = vmatprep.subr.mxu0 0.0
      %1148 = vmatpush1.msra.mxu0 0.0
      %1149 = vmatprep.subr.mxu0 0.0
      %1150 = vmatpush1.msra.mxu0 0.0
      %1151 = vmatprep.subr.mxu0 0.0
      %1152 = vmatpush1.msra.mxu0 0.0
      %1153 = vmatprep.subr.mxu0 0.0
      %1154 = vmatpush1.msra.mxu0 0.0
      %1155 = vmatprep.subr.mxu0 0.0
      %1156 = vmatpush1.msra.mxu0 0.0
      %1157 = vmatprep.subr.mxu0 0.0
      %1158 = vmatpush1.msra.mxu0 0.0
      %1159 = vmatprep.subr.mxu0 0.0
      %1160 = vmatpush1.msra.mxu0 0.0
      %1161 = vmatprep.subr.mxu0 0.0
      %1162 = vmatpush1.msra.mxu0 0.0
      %1163 = vmatprep.subr.mxu0 0.0
      %1164 = vmatpush1.msra.mxu0 0.0
      %1165 = vmatprep.subr.mxu0 0.0
      %1166 = vmatpush1.msra.mxu0 0.0
      %1167 = vmatprep.subr.mxu0 0.0
      %1168 = vmatpush1.msra.mxu0 0.0
      %1169 = vmatprep.subr.mxu0 0.0
      %1170 = vmatpush1.msra.mxu0 0.0
      %1171 = vmatprep.subr.mxu0 0.0
      %1172 = vmatpush1.msra.mxu0 0.0
      %1173 = vmatprep.subr.mxu0 0.0
      %1174 = vmatpush1.msra.mxu0 0.0
      %1175 = vmatprep.subr.mxu0 0.0
      %1176 = vmatpush1.msra.mxu0 0.0
      %1177 = vmatprep.subr.mxu0 0.0
      %1178 = vmatpush1.msra.mxu0 0.0
      %1179 = vmatprep.subr.mxu0 0.0
      %1180 = vmatpush1.msra.mxu0 0.0
      %1181 = vmatprep.subr.mxu0 0.0
      %1182 = vmatpush1.msra.mxu0 0.0
      %1183 = vmatprep.subr.mxu0 0.0
      %1184 = vmatpush1.msra.mxu0 0.0
      %1185 = vmatprep.subr.mxu0 0.0
      %1186 = vmatpush1.msra.mxu0 0.0
      %1187 = vmatprep.subr.mxu0 0.0
      %1188 = vmatpush1.msra.mxu0 0.0
      %1189 = vmatprep.subr.mxu0 0.0
      %1190 = vmatpush1.msra.mxu0 0.0
      %1191 = vmatprep.subr.mxu0 0.0
      %1192 = vmatpush1.msra.mxu0 0.0
      %1193 = vmatprep.subr.mxu0 0.0
      %1194 = vmatpush1.msra.mxu0 0.0
      %1195 = vmatprep.subr.mxu0 0.0
      %1196 = vmatpush1.msra.mxu0 0.0
      %1197 = vmatprep.subr.mxu0 0.0
      %1198 = vmatpush1.msra.mxu0 0.0
      %1199 = vmatprep.subr.mxu0 0.0
      %1200 = vmatpush1.msra.mxu0 0.0
      %1201 = vmatprep.mubr.f32.mxu0 0.0
      %1202 = vmatmul.mubr.f32.gmra.mrb[0].mxu0 %v607
      %v1203 = vpop.f32.mrb[0].mxu0
      %v1204 = vadd.f32 %v1043, %v1203
      %v1205 = vpop.f32.mrb[0].mxu0
      %v1206 = vadd.f32 %v1045, %v1205
      %1207 = vmatprep.mubr.f32.mxu0 0.0
      %1208 = vmatmul.mubr.f32.gmra.mrb[0].mxu0 %v610
      %v1209 = vpop.f32.mrb[0].mxu0
      %v1210 = vadd.f32 %v1049, %v1209
      %v1211 = vpop.f32.mrb[0].mxu0
      %v1212 = vadd.f32 %v1051, %v1211
      %1213 = vmatprep.mubr.f32.mxu0 0.0
      %1214 = vmatmul.mubr.f32.gmra.mrb[0].mxu0 %v613
      %v1215 = vpop.f32.mrb[0].mxu0
      %v1216 = vadd.f32 %v1055, %v1215
      %v1217 = vpop.f32.mrb[0].mxu0
      %v1218 = vadd.f32 %v1057, %v1217
      %1219 = vmatprep.mubr.f32.mxu0 0.0
      %1220 = vmatmul.mubr.f32.gmra.mrb[0].mxu0 %v616
      %v1221 = vpop.f32.mrb[0].mxu0
      %v1222 = vadd.f32 %v1061, %v1221
      %v1223 = vpop.f32.mrb[0].mxu0
      %v1224 = vadd.f32 %v1063, %v1223
      %1225 = vmatprep.mubr.f32.mxu0 0.0
      %1226 = vmatmul.mubr.f32.gmra.mrb[0].mxu0 %v619
      %v1227 = vpop.f32.mrb[0].mxu0
      %v1228 = vadd.f32 %v1067, %v1227
      %v1229 = vpop.f32.mrb[0].mxu0
      %v1230 = vadd.f32 %v1069, %v1229
      %1231 = vmatprep.mubr.f32.mxu0 0.0
      %1232 = vmatmul.mubr.f32.gmra.mrb[0].mxu0 %v622
      %v1233 = vpop.f32.mrb[0].mxu0
      %v1234 = vadd.f32 %v1073, %v1233
      %v1235 = vpop.f32.mrb[0].mxu0
      %v1236 = vadd.f32 %v1075, %v1235
      %1237 = vmatprep.mubr.f32.mxu0 0.0
      %1238 = vmatmul.mubr.f32.gmra.mrb[0].mxu0 %v625
      %v1239 = vpop.f32.mrb[0].mxu0
      %v1240 = vadd.f32 %v1079, %v1239
      %v1241 = vpop.f32.mrb[0].mxu0
      %v1242 = vadd.f32 %v1081, %v1241
      %1243 = vmatprep.mubr.f32.mxu0 0.0
      %1244 = vmatmul.mubr.f32.gmra.mrb[0].mxu0 %v628
      %v1245 = vpop.f32.mrb[0].mxu0
      %v1246 = vadd.f32 %v1085, %v1245
      %v1247 = vpop.f32.mrb[0].mxu0
      %v1248 = vadd.f32 %v1087, %v1247
      %1249 = vmatprep.mubr.f32.mxu0 0.0
      %1250 = vmatmul.mubr.f32.gmra.mrb[0].mxu0 %v631
      %v1251 = vpop.f32.mrb[0].mxu0
      %v1252 = vadd.f32 %v1091, %v1251
      %v1253 = vpop.f32.mrb[0].mxu0
      %v1254 = vadd.f32 %v1093, %v1253
      %1255 = vmatprep.mubr.f32.mxu0 0.0
      %1256 = vmatmul.mubr.f32.gmra.mrb[0].mxu0 %v634
      %v1257 = vpop.f32.mrb[0].mxu0
      %v1258 = vadd.f32 %v1097, %v1257
      %v1259 = vpop.f32.mrb[0].mxu0
      %v1260 = vadd.f32 %v1099, %v1259
      %1261 = vmatprep.mubr.f32.mxu0 0.0
      %1262 = vmatmul.mubr.f32.gmra.mrb[0].mxu0 %v637
      %v1263 = vpop.f32.mrb[0].mxu0
      %v1264 = vadd.f32 %v1103, %v1263
      %v1265 = vpop.f32.mrb[0].mxu0
      %v1266 = vadd.f32 %v1105, %v1265
      %1267 = vmatprep.mubr.f32.mxu0 0.0
      %1268 = vmatmul.mubr.f32.gmra.mrb[0].mxu0 %v640
      %v1269 = vpop.f32.mrb[0].mxu0
      %v1270 = vadd.f32 %v1109, %v1269
      %v1271 = vpop.f32.mrb[0].mxu0
      %v1272 = vadd.f32 %v1111, %v1271
      %1273 = vmatprep.mubr.f32.mxu0 0.0
      %1274 = vmatmul.mubr.f32.gmra.mrb[0].mxu0 %v643
      %v1275 = vpop.f32.mrb[0].mxu0
      %v1276 = vadd.f32 %v1115, %v1275
      %v1277 = vpop.f32.mrb[0].mxu0
      %v1278 = vadd.f32 %v1117, %v1277
      %1279 = vmatprep.mubr.f32.mxu0 0.0
      %1280 = vmatmul.mubr.f32.gmra.mrb[0].mxu0 %v646
      %v1281 = vpop.f32.mrb[0].mxu0
      %v1282 = vadd.f32 %v1121, %v1281
      %v1283 = vpop.f32.mrb[0].mxu0
      %v1284 = vadd.f32 %v1123, %v1283
      %1285 = vmatprep.mubr.f32.mxu0 0.0
      %1286 = vmatmul.mubr.f32.gmra.mrb[0].mxu0 %v649
      %v1287 = vpop.f32.mrb[0].mxu0
      %v1288 = vadd.f32 %v1127, %v1287
      %v1289 = vpop.f32.mrb[0].mxu0
      %v1290 = vadd.f32 %v1129, %v1289
      %1291 = vmatprep.mubr.f32.mxu0 0.0
      %1292 = vmatmul.mubr.f32.gmra.mrb[0].mxu0 %v652
      %v1293 = vpop.f32.mrb[0].mxu0
      %v1294 = vadd.f32 %v1133, %v1293
      %v1295 = vpop.f32.mrb[0].mxu0
      %v1296 = vadd.f32 %v1135, %v1295
      %1297 = vdwg.mxu0
      %v1298 = vmax.f32 %v1204, 0.0
      %v1299 = vmax.f32 %v1206, 0.0
      %v1300 = vmax.f32 %v1210, 0.0
      %v1301 = vmax.f32 %v1212, 0.0
      %v1302 = vmax.f32 %v1216, 0.0
      %v1303 = vmax.f32 %v1218, 0.0
      %v1304 = vmax.f32 %v1222, 0.0
      %v1305 = vmax.f32 %v1224, 0.0
      %v1306 = vmax.f32 %v1228, 0.0
      %v1307 = vmax.f32 %v1230, 0.0
      %v1308 = vmax.f32 %v1234, 0.0
      %v1309 = vmax.f32 %v1236, 0.0
      %v1310 = vmax.f32 %v1240, 0.0
      %v1311 = vmax.f32 %v1242, 0.0
      %v1312 = vmax.f32 %v1246, 0.0
      %v1313 = vmax.f32 %v1248, 0.0
      %v1314 = vmax.f32 %v1252, 0.0
      %v1315 = vmax.f32 %v1254, 0.0
      %v1316 = vmax.f32 %v1258, 0.0
      %v1317 = vmax.f32 %v1260, 0.0
      %v1318 = vmax.f32 %v1264, 0.0
      %v1319 = vmax.f32 %v1266, 0.0
      %v1320 = vmax.f32 %v1270, 0.0
      %v1321 = vmax.f32 %v1272, 0.0
      %v1322 = vmax.f32 %v1276, 0.0
      %v1323 = vmax.f32 %v1278, 0.0
      %v1324 = vmax.f32 %v1282, 0.0
      %v1325 = vmax.f32 %v1284, 0.0
      %v1326 = vmax.f32 %v1288, 0.0
      %v1327 = vmax.f32 %v1290, 0.0
      %v1328 = vmax.f32 %v1294, 0.0
      %v1329 = vmax.f32 %v1296, 0.0
      %v1330 = vld [vmem:[%s3] sm:$0xff]
      %v1331 = vld [vmem:[%s3 + $0x8] sm:$0xff]
      %v1332 = vld [vmem:[%s3 + $0x10] sm:$0xff]
      %v1333 = vld [vmem:[%s3 + $0x18] sm:$0xff]
      %v1334 = vld [vmem:[%s3 + $0x20] sm:$0xff]
      %v1335 = vld [vmem:[%s3 + $0x28] sm:$0xff]
      %v1336 = vld [vmem:[%s3 + $0x30] sm:$0xff]
      %v1337 = vld [vmem:[%s3 + $0x38] sm:$0xff]
      %v1338 = vld [vmem:[%s3 + $0x40] sm:$0xff]
      %v1339 = vld [vmem:[%s3 + $0x48] sm:$0xff]
      %v1340 = vld [vmem:[%s3 + $0x50] sm:$0xff]
      %v1341 = vld [vmem:[%s3 + $0x58] sm:$0xff]
      %v1342 = vld [vmem:[%s3 + $0x60] sm:$0xff]
      %v1343 = vld [vmem:[%s3 + $0x68] sm:$0xff]
      %v1344 = vld [vmem:[%s3 + $0x70] sm:$0xff]
      %v1345 = vld [vmem:[%s3 + $0x78] sm:$0xff]
      %v1346 = vld [vmem:[%s3 + $0x80] sm:$0xff]
      %v1347 = vld [vmem:[%s3 + $0x88] sm:$0xff]
      %v1348 = vld [vmem:[%s3 + $0x90] sm:$0xff]
      %v1349 = vld [vmem:[%s3 + $0x98] sm:$0xff]
      %v1350 = vld [vmem:[%s3 + $0xa0] sm:$0xff]
      %v1351 = vld [vmem:[%s3 + $0xa8] sm:$0xff]
      %v1352 = vld [vmem:[%s3 + $0xb0] sm:$0xff]
      %v1353 = vld [vmem:[%s3 + $0xb8] sm:$0xff]
      %v1354 = vld [vmem:[%s3 + $0xc0] sm:$0xff]
      %v1355 = vld [vmem:[%s3 + $0xc8] sm:$0xff]
      %v1356 = vld [vmem:[%s3 + $0xd0] sm:$0xff]
      %v1357 = vld [vmem:[%s3 + $0xd8] sm:$0xff]
      %v1358 = vld [vmem:[%s3 + $0xe0] sm:$0xff]
      %v1359 = vld [vmem:[%s3 + $0xe8] sm:$0xff]
      %v1360 = vld [vmem:[%s3 + $0xf0] sm:$0xff]
      %v1361 = vld [vmem:[%s3 + $0xf8] sm:$0xff]
      %v1362 = vld [vmem:[%s3 + $0x100] sm:$0xff]
      %v1363 = vld [vmem:[%s3 + $0x108] sm:$0xff]
      %v1364 = vld [vmem:[%s3 + $0x110] sm:$0xff]
      %v1365 = vld [vmem:[%s3 + $0x118] sm:$0xff]
      %v1366 = vld [vmem:[%s3 + $0x120] sm:$0xff]
      %v1367 = vld [vmem:[%s3 + $0x128] sm:$0xff]
      %v1368 = vld [vmem:[%s3 + $0x130] sm:$0xff]
      %v1369 = vld [vmem:[%s3 + $0x138] sm:$0xff]
      %v1370 = vld [vmem:[%s3 + $0x140] sm:$0xff]
      %v1371 = vld [vmem:[%s3 + $0x148] sm:$0xff]
      %v1372 = vld [vmem:[%s3 + $0x150] sm:$0xff]
      %v1373 = vld [vmem:[%s3 + $0x158] sm:$0xff]
      %v1374 = vld [vmem:[%s3 + $0x160] sm:$0xff]
      %v1375 = vld [vmem:[%s3 + $0x168] sm:$0xff]
      %v1376 = vld [vmem:[%s3 + $0x170] sm:$0xff]
      %v1377 = vld [vmem:[%s3 + $0x178] sm:$0xff]
      %v1378 = vld [vmem:[%s3 + $0x180] sm:$0xff]
      %v1379 = vld [vmem:[%s3 + $0x188] sm:$0xff]
      %v1380 = vld [vmem:[%s3 + $0x190] sm:$0xff]
      %v1381 = vld [vmem:[%s3 + $0x198] sm:$0xff]
      %v1382 = vld [vmem:[%s3 + $0x1a0] sm:$0xff]
      %v1383 = vld [vmem:[%s3 + $0x1a8] sm:$0xff]
      %v1384 = vld [vmem:[%s3 + $0x1b0] sm:$0xff]
      %v1385 = vld [vmem:[%s3 + $0x1b8] sm:$0xff]
      %v1386 = vld [vmem:[%s3 + $0x1c0] sm:$0xff]
      %v1387 = vld [vmem:[%s3 + $0x1c8] sm:$0xff]
      %v1388 = vld [vmem:[%s3 + $0x1d0] sm:$0xff]
      %v1389 = vld [vmem:[%s3 + $0x1d8] sm:$0xff]
      %v1390 = vld [vmem:[%s3 + $0x1e0] sm:$0xff]
      %v1391 = vld [vmem:[%s3 + $0x1e8] sm:$0xff]
      %v1392 = vld [vmem:[%s3 + $0x1f0] sm:$0xff]
      %v1393 = vld [vmem:[%s3 + $0x1f8] sm:$0xff]
      %v1394 = vld [vmem:[%s3 + $0x200] sm:$0xff]
      %v1395 = vld [vmem:[%s3 + $0x208] sm:$0xff]
      %v1396 = vld [vmem:[%s3 + $0x210] sm:$0xff]
      %v1397 = vld [vmem:[%s3 + $0x218] sm:$0xff]
      %v1398 = vld [vmem:[%s3 + $0x220] sm:$0xff]
      %v1399 = vld [vmem:[%s3 + $0x228] sm:$0xff]
      %v1400 = vld [vmem:[%s3 + $0x230] sm:$0xff]
      %v1401 = vld [vmem:[%s3 + $0x238] sm:$0xff]
      %v1402 = vld [vmem:[%s3 + $0x240] sm:$0xff]
      %v1403 = vld [vmem:[%s3 + $0x248] sm:$0xff]
      %v1404 = vld [vmem:[%s3 + $0x250] sm:$0xff]
      %v1405 = vld [vmem:[%s3 + $0x258] sm:$0xff]
      %v1406 = vld [vmem:[%s3 + $0x260] sm:$0xff]
      %v1407 = vld [vmem:[%s3 + $0x268] sm:$0xff]
      %v1408 = vld [vmem:[%s3 + $0x270] sm:$0xff]
      %v1409 = vld [vmem:[%s3 + $0x278] sm:$0xff]
      %v1410 = vld [vmem:[%s3 + $0x280] sm:$0xff]
      %v1411 = vld [vmem:[%s3 + $0x288] sm:$0xff]
      %v1412 = vld [vmem:[%s3 + $0x290] sm:$0xff]
      %v1413 = vld [vmem:[%s3 + $0x298] sm:$0xff]
      %v1414 = vld [vmem:[%s3 + $0x2a0] sm:$0xff]
      %v1415 = vld [vmem:[%s3 + $0x2a8] sm:$0xff]
      %v1416 = vld [vmem:[%s3 + $0x2b0] sm:$0xff]
      %v1417 = vld [vmem:[%s3 + $0x2b8] sm:$0xff]
      %v1418 = vld [vmem:[%s3 + $0x2c0] sm:$0xff]
      %v1419 = vld [vmem:[%s3 + $0x2c8] sm:$0xff]
      %v1420 = vld [vmem:[%s3 + $0x2d0] sm:$0xff]
      %v1421 = vld [vmem:[%s3 + $0x2d8] sm:$0xff]
      %v1422 = vld [vmem:[%s3 + $0x2e0] sm:$0xff]
      %v1423 = vld [vmem:[%s3 + $0x2e8] sm:$0xff]
      %v1424 = vld [vmem:[%s3 + $0x2f0] sm:$0xff]
      %v1425 = vld [vmem:[%s3 + $0x2f8] sm:$0xff]
      %v1426 = vld [vmem:[%s3 + $0x300] sm:$0xff]
      %v1427 = vld [vmem:[%s3 + $0x308] sm:$0xff]
      %v1428 = vld [vmem:[%s3 + $0x310] sm:$0xff]
      %v1429 = vld [vmem:[%s3 + $0x318] sm:$0xff]
      %v1430 = vld [vmem:[%s3 + $0x320] sm:$0xff]
      %v1431 = vld [vmem:[%s3 + $0x328] sm:$0xff]
      %v1432 = vld [vmem:[%s3 + $0x330] sm:$0xff]
      %v1433 = vld [vmem:[%s3 + $0x338] sm:$0xff]
      %v1434 = vld [vmem:[%s3 + $0x340] sm:$0xff]
      %v1435 = vld [vmem:[%s3 + $0x348] sm:$0xff]
      %v1436 = vld [vmem:[%s3 + $0x350] sm:$0xff]
      %v1437 = vld [vmem:[%s3 + $0x358] sm:$0xff]
      %v1438 = vld [vmem:[%s3 + $0x360] sm:$0xff]
      %v1439 = vld [vmem:[%s3 + $0x368] sm:$0xff]
      %v1440 = vld [vmem:[%s3 + $0x370] sm:$0xff]
      %v1441 = vld [vmem:[%s3 + $0x378] sm:$0xff]
      %v1442 = vld [vmem:[%s3 + $0x380] sm:$0xff]
      %v1443 = vld [vmem:[%s3 + $0x388] sm:$0xff]
      %v1444 = vld [vmem:[%s3 + $0x390] sm:$0xff]
      %v1445 = vld [vmem:[%s3 + $0x398] sm:$0xff]
      %v1446 = vld [vmem:[%s3 + $0x3a0] sm:$0xff]
      %v1447 = vld [vmem:[%s3 + $0x3a8] sm:$0xff]
      %v1448 = vld [vmem:[%s3 + $0x3b0] sm:$0xff]
      %v1449 = vld [vmem:[%s3 + $0x3b8] sm:$0xff]
      %v1450 = vld [vmem:[%s3 + $0x3c0] sm:$0xff]
      %v1451 = vld [vmem:[%s3 + $0x3c8] sm:$0xff]
      %v1452 = vld [vmem:[%s3 + $0x3d0] sm:$0xff]
      %v1453 = vld [vmem:[%s3 + $0x3d8] sm:$0xff]
      %v1454 = vld [vmem:[%s3 + $0x3e0] sm:$0xff]
      %v1455 = vld [vmem:[%s3 + $0x3e8] sm:$0xff]
      %v1456 = vld [vmem:[%s3 + $0x3f0] sm:$0xff]
      %v1457 = vld [vmem:[%s3 + $0x3f8] sm:$0xff]
      %v1458 = vld [vmem:[%s4] sm:$0xf]
      %v1460 = vlaneseq
      %v1461 = vshrl.u32 %v1460, 7
      %v1462 = vsub.s32 0, %v1461
      %v1463 = vrot.slane %v1458, %v1462
      %v1464 = vlaneseq
      %v1465 = vshrl.u32 %v1464, 7
      %v1466 = vsub.s32 1, %v1465
      %v1467 = vrot.slane %v1458, %v1466
      %v1468 = vlaneseq
      %v1469 = vshrl.u32 %v1468, 7
      %v1470 = vsub.s32 2, %v1469
      %v1471 = vrot.slane %v1458, %v1470
      %v1472 = vlaneseq
      %v1473 = vshrl.u32 %v1472, 7
      %v1474 = vsub.s32 3, %v1473
      %v1475 = vrot.slane %v1458, %v1474
      %1480 = vmatprep.subr.mxu0 %v1331
      %1481 = vmatpush1.msra.mxu0 %v1330
      %1482 = vmatprep.subr.mxu0 %v1335
      %1483 = vmatpush1.msra.mxu0 %v1334
      %1484 = vmatprep.subr.mxu0 %v1339
      %1485 = vmatpush1.msra.mxu0 %v1338
      %1486 = vmatprep.subr.mxu0 %v1343
      %1487 = vmatpush1.msra.mxu0 %v1342
      %1488 = vmatprep.subr.mxu0 %v1347
      %1489 = vmatpush1.msra.mxu0 %v1346
      %1490 = vmatprep.subr.mxu0 %v1351
      %1491 = vmatpush1.msra.mxu0 %v1350
      %1492 = vmatprep.subr.mxu0 %v1355
      %1493 = vmatpush1.msra.mxu0 %v1354
      %1494 = vmatprep.subr.mxu0 %v1359
      %1495 = vmatpush1.msra.mxu0 %v1358
      %1496 = vmatprep.subr.mxu0 %v1363
      %1497 = vmatpush1.msra.mxu0 %v1362
      %1498 = vmatprep.subr.mxu0 %v1367
      %1499 = vmatpush1.msra.mxu0 %v1366
      %1500 = vmatprep.subr.mxu0 %v1371
      %1501 = vmatpush1.msra.mxu0 %v1370
      %1502 = vmatprep.subr.mxu0 %v1375
      %1503 = vmatpush1.msra.mxu0 %v1374
      %1504 = vmatprep.subr.mxu0 %v1379
      %1505 = vmatpush1.msra.mxu0 %v1378
      %1506 = vmatprep.subr.mxu0 %v1383
      %1507 = vmatpush1.msra.mxu0 %v1382
      %1508 = vmatprep.subr.mxu0 %v1387
      %1509 = vmatpush1.msra.mxu0 %v1386
      %1510 = vmatprep.subr.mxu0 %v1391
      %1511 = vmatpush1.msra.mxu0 %v1390
      %1512 = vmatprep.subr.mxu0 %v1395
      %1513 = vmatpush1.msra.mxu0 %v1394
      %1514 = vmatprep.subr.mxu0 %v1399
      %1515 = vmatpush1.msra.mxu0 %v1398
      %1516 = vmatprep.subr.mxu0 %v1403
      %1517 = vmatpush1.msra.mxu0 %v1402
      %1518 = vmatprep.subr.mxu0 %v1407
      %1519 = vmatpush1.msra.mxu0 %v1406
      %1520 = vmatprep.subr.mxu0 %v1411
      %1521 = vmatpush1.msra.mxu0 %v1410
      %1522 = vmatprep.subr.mxu0 %v1415
      %1523 = vmatpush1.msra.mxu0 %v1414
      %1524 = vmatprep.subr.mxu0 %v1419
      %1525 = vmatpush1.msra.mxu0 %v1418
      %1526 = vmatprep.subr.mxu0 %v1423
      %1527 = vmatpush1.msra.mxu0 %v1422
      %1528 = vmatprep.subr.mxu0 %v1427
      %1529 = vmatpush1.msra.mxu0 %v1426
      %1530 = vmatprep.subr.mxu0 %v1431
      %1531 = vmatpush1.msra.mxu0 %v1430
      %1532 = vmatprep.subr.mxu0 %v1435
      %1533 = vmatpush1.msra.mxu0 %v1434
      %1534 = vmatprep.subr.mxu0 %v1439
      %1535 = vmatpush1.msra.mxu0 %v1438
      %1536 = vmatprep.subr.mxu0 %v1443
      %1537 = vmatpush1.msra.mxu0 %v1442
      %1538 = vmatprep.subr.mxu0 %v1447
      %1539 = vmatpush1.msra.mxu0 %v1446
      %1540 = vmatprep.subr.mxu0 %v1451
      %1541 = vmatpush1.msra.mxu0 %v1450
      %1542 = vmatprep.subr.mxu0 %v1455
      %1543 = vmatpush1.msra.mxu0 %v1454
      %1544 = vmatprep.mubr.f32.mxu0 %v1299
      %1545 = vmatmul.mubr.f32.gmra.mrb[0].mxu0 %v1298
      %v1546 = vpop.f32.mrb[0].mxu0
      %v1547 = vadd.f32 %v1463, %v1546
      %v1548 = vpop.f32.mrb[0].mxu0
      %v1549 = vadd.f32 %v1467, %v1548
      %1550 = vmatprep.mubr.f32.mxu0 %v1301
      %1551 = vmatmul.mubr.f32.gmra.mrb[0].mxu0 %v1300
      %v1552 = vpop.f32.mrb[0].mxu0
      %v1553 = vadd.f32 %v1463, %v1552
      %v1554 = vpop.f32.mrb[0].mxu0
      %v1555 = vadd.f32 %v1467, %v1554
      %1556 = vmatprep.mubr.f32.mxu0 %v1303
      %1557 = vmatmul.mubr.f32.gmra.mrb[0].mxu0 %v1302
      %v1558 = vpop.f32.mrb[0].mxu0
      %v1559 = vadd.f32 %v1463, %v1558
      %v1560 = vpop.f32.mrb[0].mxu0
      %v1561 = vadd.f32 %v1467, %v1560
      %1562 = vmatprep.mubr.f32.mxu0 %v1305
      %1563 = vmatmul.mubr.f32.gmra.mrb[0].mxu0 %v1304
      %v1564 = vpop.f32.mrb[0].mxu0
      %v1565 = vadd.f32 %v1463, %v1564
      %v1566 = vpop.f32.mrb[0].mxu0
      %v1567 = vadd.f32 %v1467, %v1566
      %1568 = vmatprep.mubr.f32.mxu0 %v1307
      %1569 = vmatmul.mubr.f32.gmra.mrb[0].mxu0 %v1306
      %v1570 = vpop.f32.mrb[0].mxu0
      %v1571 = vadd.f32 %v1463, %v1570
      %v1572 = vpop.f32.mrb[0].mxu0
      %v1573 = vadd.f32 %v1467, %v1572
      %1574 = vmatprep.mubr.f32.mxu0 %v1309
      %1575 = vmatmul.mubr.f32.gmra.mrb[0].mxu0 %v1308
      %v1576 = vpop.f32.mrb[0].mxu0
      %v1577 = vadd.f32 %v1463, %v1576
      %v1578 = vpop.f32.mrb[0].mxu0
      %v1579 = vadd.f32 %v1467, %v1578
      %1580 = vmatprep.mubr.f32.mxu0 %v1311
      %1581 = vmatmul.mubr.f32.gmra.mrb[0].mxu0 %v1310
      %v1582 = vpop.f32.mrb[0].mxu0
      %v1583 = vadd.f32 %v1463, %v1582
      %v1584 = vpop.f32.mrb[0].mxu0
      %v1585 = vadd.f32 %v1467, %v1584
      %1586 = vmatprep.mubr.f32.mxu0 %v1313
      %1587 = vmatmul.mubr.f32.gmra.mrb[0].mxu0 %v1312
      %v1588 = vpop.f32.mrb[0].mxu0
      %v1589 = vadd.f32 %v1463, %v1588
      %v1590 = vpop.f32.mrb[0].mxu0
      %v1591 = vadd.f32 %v1467, %v1590
      %1592 = vmatprep.mubr.f32.mxu0 %v1315
      %1593 = vmatmul.mubr.f32.gmra.mrb[0].mxu0 %v1314
      %v1594 = vpop.f32.mrb[0].mxu0
      %v1595 = vadd.f32 %v1463, %v1594
      %v1596 = vpop.f32.mrb[0].mxu0
      %v1597 = vadd.f32 %v1467, %v1596
      %1598 = vmatprep.mubr.f32.mxu0 %v1317
      %1599 = vmatmul.mubr.f32.gmra.mrb[0].mxu0 %v1316
      %v1600 = vpop.f32.mrb[0].mxu0
      %v1601 = vadd.f32 %v1463, %v1600
      %v1602 = vpop.f32.mrb[0].mxu0
      %v1603 = vadd.f32 %v1467, %v1602
      %1604 = vmatprep.mubr.f32.mxu0 %v1319
      %1605 = vmatmul.mubr.f32.gmra.mrb[0].mxu0 %v1318
      %v1606 = vpop.f32.mrb[0].mxu0
      %v1607 = vadd.f32 %v1463, %v1606
      %v1608 = vpop.f32.mrb[0].mxu0
      %v1609 = vadd.f32 %v1467, %v1608
      %1610 = vmatprep.mubr.f32.mxu0 %v1321
      %1611 = vmatmul.mubr.f32.gmra.mrb[0].mxu0 %v1320
      %v1612 = vpop.f32.mrb[0].mxu0
      %v1613 = vadd.f32 %v1463, %v1612
      %v1614 = vpop.f32.mrb[0].mxu0
      %v1615 = vadd.f32 %v1467, %v1614
      %1616 = vmatprep.mubr.f32.mxu0 %v1323
      %1617 = vmatmul.mubr.f32.gmra.mrb[0].mxu0 %v1322
      %v1618 = vpop.f32.mrb[0].mxu0
      %v1619 = vadd.f32 %v1463, %v1618
      %v1620 = vpop.f32.mrb[0].mxu0
      %v1621 = vadd.f32 %v1467, %v1620
      %1622 = vmatprep.mubr.f32.mxu0 %v1325
      %1623 = vmatmul.mubr.f32.gmra.mrb[0].mxu0 %v1324
      %v1624 = vpop.f32.mrb[0].mxu0
      %v1625 = vadd.f32 %v1463, %v1624
      %v1626 = vpop.f32.mrb[0].mxu0
      %v1627 = vadd.f32 %v1467, %v1626
      %1628 = vmatprep.mubr.f32.mxu0 %v1327
      %1629 = vmatmul.mubr.f32.gmra.mrb[0].mxu0 %v1326
      %v1630 = vpop.f32.mrb[0].mxu0
      %v1631 = vadd.f32 %v1463, %v1630
      %v1632 = vpop.f32.mrb[0].mxu0
      %v1633 = vadd.f32 %v1467, %v1632
      %1634 = vmatprep.mubr.f32.mxu0 %v1329
      %1635 = vmatmul.mubr.f32.gmra.mrb[0].mxu0 %v1328
      %v1636 = vpop.f32.mrb[0].mxu0
      %v1637 = vadd.f32 %v1463, %v1636
      %v1638 = vpop.f32.mrb[0].mxu0
      %v1639 = vadd.f32 %v1467, %v1638
      %1640 = vdwg.mxu0
      %1641 = vmatprep.subr.mxu0 %v1333
      %1642 = vmatpush1.msra.mxu0 %v1332
      %1643 = vmatprep.subr.mxu0 %v1337
      %1644 = vmatpush1.msra.mxu0 %v1336
      %1645 = vmatprep.subr.mxu0 %v1341
      %1646 = vmatpush1.msra.mxu0 %v1340
      %1647 = vmatprep.subr.mxu0 %v1345
      %1648 = vmatpush1.msra.mxu0 %v1344
      %1649 = vmatprep.subr.mxu0 %v1349
      %1650 = vmatpush1.msra.mxu0 %v1348
      %1651 = vmatprep.subr.mxu0 %v1353
      %1652 = vmatpush1.msra.mxu0 %v1352
      %1653 = vmatprep.subr.mxu0 %v1357
      %1654 = vmatpush1.msra.mxu0 %v1356
      %1655 = vmatprep.subr.mxu0 %v1361
      %1656 = vmatpush1.msra.mxu0 %v1360
      %1657 = vmatprep.subr.mxu0 %v1365
      %1658 = vmatpush1.msra.mxu0 %v1364
      %1659 = vmatprep.subr.mxu0 %v1369
      %1660 = vmatpush1.msra.mxu0 %v1368
      %1661 = vmatprep.subr.mxu0 %v1373
      %1662 = vmatpush1.msra.mxu0 %v1372
      %1663 = vmatprep.subr.mxu0 %v1377
      %1664 = vmatpush1.msra.mxu0 %v1376
      %1665 = vmatprep.subr.mxu0 %v1381
      %1666 = vmatpush1.msra.mxu0 %v1380
      %1667 = vmatprep.subr.mxu0 %v1385
      %1668 = vmatpush1.msra.mxu0 %v1384
      %1669 = vmatprep.subr.mxu0 %v1389
      %1670 = vmatpush1.msra.mxu0 %v1388
      %1671 = vmatprep.subr.mxu0 %v1393
      %1672 = vmatpush1.msra.mxu0 %v1392
      %1673 = vmatprep.subr.mxu0 %v1397
      %1674 = vmatpush1.msra.mxu0 %v1396
      %1675 = vmatprep.subr.mxu0 %v1401
      %1676 = vmatpush1.msra.mxu0 %v1400
      %1677 = vmatprep.subr.mxu0 %v1405
      %1678 = vmatpush1.msra.mxu0 %v1404
      %1679 = vmatprep.subr.mxu0 %v1409
      %1680 = vmatpush1.msra.mxu0 %v1408
      %1681 = vmatprep.subr.mxu0 %v1413
      %1682 = vmatpush1.msra.mxu0 %v1412
      %1683 = vmatprep.subr.mxu0 %v1417
      %1684 = vmatpush1.msra.mxu0 %v1416
      %1685 = vmatprep.subr.mxu0 %v1421
      %1686 = vmatpush1.msra.mxu0 %v1420
      %1687 = vmatprep.subr.mxu0 %v1425
      %1688 = vmatpush1.msra.mxu0 %v1424
      %1689 = vmatprep.subr.mxu0 %v1429
      %1690 = vmatpush1.msra.mxu0 %v1428
      %1691 = vmatprep.subr.mxu0 %v1433
      %1692 = vmatpush1.msra.mxu0 %v1432
      %1693 = vmatprep.subr.mxu0 %v1437
      %1694 = vmatpush1.msra.mxu0 %v1436
      %1695 = vmatprep.subr.mxu0 %v1441
      %1696 = vmatpush1.msra.mxu0 %v1440
      %1697 = vmatprep.subr.mxu0 %v1445
      %1698 = vmatpush1.msra.mxu0 %v1444
      %1699 = vmatprep.subr.mxu0 %v1449
      %1700 = vmatpush1.msra.mxu0 %v1448
      %1701 = vmatprep.subr.mxu0 %v1453
      %1702 = vmatpush1.msra.mxu0 %v1452
      %1703 = vmatprep.subr.mxu0 %v1457
      %1704 = vmatpush1.msra.mxu0 %v1456
      %1705 = vmatprep.mubr.f32.mxu0 %v1299
      %1706 = vmatmul.mubr.f32.gmra.mrb[0].mxu0 %v1298
      %v1707 = vpop.f32.mrb[0].mxu0
      %v1708 = vadd.f32 %v1471, %v1707
      %v1709 = vpop.f32.mrb[0].mxu0
      %v1710 = vadd.f32 %v1475, %v1709
      %1711 = vmatprep.mubr.f32.mxu0 %v1301
      %1712 = vmatmul.mubr.f32.gmra.mrb[0].mxu0 %v1300
      %v1713 = vpop.f32.mrb[0].mxu0
      %v1714 = vadd.f32 %v1471, %v1713
      %v1715 = vpop.f32.mrb[0].mxu0
      %v1716 = vadd.f32 %v1475, %v1715
      %1717 = vmatprep.mubr.f32.mxu0 %v1303
      %1718 = vmatmul.mubr.f32.gmra.mrb[0].mxu0 %v1302
      %v1719 = vpop.f32.mrb[0].mxu0
      %v1720 = vadd.f32 %v1471, %v1719
      %v1721 = vpop.f32.mrb[0].mxu0
      %v1722 = vadd.f32 %v1475, %v1721
      %1723 = vmatprep.mubr.f32.mxu0 %v1305
      %1724 = vmatmul.mubr.f32.gmra.mrb[0].mxu0 %v1304
      %v1725 = vpop.f32.mrb[0].mxu0
      %v1726 = vadd.f32 %v1471, %v1725
      %v1727 = vpop.f32.mrb[0].mxu0
      %v1728 = vadd.f32 %v1475, %v1727
      %1729 = vmatprep.mubr.f32.mxu0 %v1307
      %1730 = vmatmul.mubr.f32.gmra.mrb[0].mxu0 %v1306
      %v1731 = vpop.f32.mrb[0].mxu0
      %v1732 = vadd.f32 %v1471, %v1731
      %v1733 = vpop.f32.mrb[0].mxu0
      %v1734 = vadd.f32 %v1475, %v1733
      %1735 = vmatprep.mubr.f32.mxu0 %v1309
      %1736 = vmatmul.mubr.f32.gmra.mrb[0].mxu0 %v1308
      %v1737 = vpop.f32.mrb[0].mxu0
      %v1738 = vadd.f32 %v1471, %v1737
      %v1739 = vpop.f32.mrb[0].mxu0
      %v1740 = vadd.f32 %v1475, %v1739
      %1741 = vmatprep.mubr.f32.mxu0 %v1311
      %1742 = vmatmul.mubr.f32.gmra.mrb[0].mxu0 %v1310
      %v1743 = vpop.f32.mrb[0].mxu0
      %v1744 = vadd.f32 %v1471, %v1743
      %v1745 = vpop.f32.mrb[0].mxu0
      %v1746 = vadd.f32 %v1475, %v1745
      %1747 = vmatprep.mubr.f32.mxu0 %v1313
      %1748 = vmatmul.mubr.f32.gmra.mrb[0].mxu0 %v1312
      %v1749 = vpop.f32.mrb[0].mxu0
      %v1750 = vadd.f32 %v1471, %v1749
      %v1751 = vpop.f32.mrb[0].mxu0
      %v1752 = vadd.f32 %v1475, %v1751
      %1753 = vmatprep.mubr.f32.mxu0 %v1315
      %1754 = vmatmul.mubr.f32.gmra.mrb[0].mxu0 %v1314
      %v1755 = vpop.f32.mrb[0].mxu0
      %v1756 = vadd.f32 %v1471, %v1755
      %v1757 = vpop.f32.mrb[0].mxu0
      %v1758 = vadd.f32 %v1475, %v1757
      %1759 = vmatprep.mubr.f32.mxu0 %v1317
      %1760 = vmatmul.mubr.f32.gmra.mrb[0].mxu0 %v1316
      %v1761 = vpop.f32.mrb[0].mxu0
      %v1762 = vadd.f32 %v1471, %v1761
      %v1763 = vpop.f32.mrb[0].mxu0
      %v1764 = vadd.f32 %v1475, %v1763
      %1765 = vmatprep.mubr.f32.mxu0 %v1319
      %1766 = vmatmul.mubr.f32.gmra.mrb[0].mxu0 %v1318
      %v1767 = vpop.f32.mrb[0].mxu0
      %v1768 = vadd.f32 %v1471, %v1767
      %v1769 = vpop.f32.mrb[0].mxu0
      %v1770 = vadd.f32 %v1475, %v1769
      %1771 = vmatprep.mubr.f32.mxu0 %v1321
      %1772 = vmatmul.mubr.f32.gmra.mrb[0].mxu0 %v1320
      %v1773 = vpop.f32.mrb[0].mxu0
      %v1774 = vadd.f32 %v1471, %v1773
      %v1775 = vpop.f32.mrb[0].mxu0
      %v1776 = vadd.f32 %v1475, %v1775
      %1777 = vmatprep.mubr.f32.mxu0 %v1323
      %1778 = vmatmul.mubr.f32.gmra.mrb[0].mxu0 %v1322
      %v1779 = vpop.f32.mrb[0].mxu0
      %v1780 = vadd.f32 %v1471, %v1779
      %v1781 = vpop.f32.mrb[0].mxu0
      %v1782 = vadd.f32 %v1475, %v1781
      %1783 = vmatprep.mubr.f32.mxu0 %v1325
      %1784 = vmatmul.mubr.f32.gmra.mrb[0].mxu0 %v1324
      %v1785 = vpop.f32.mrb[0].mxu0
      %v1786 = vadd.f32 %v1471, %v1785
      %v1787 = vpop.f32.mrb[0].mxu0
      %v1788 = vadd.f32 %v1475, %v1787
      %1789 = vmatprep.mubr.f32.mxu0 %v1327
      %1790 = vmatmul.mubr.f32.gmra.mrb[0].mxu0 %v1326
      %v1791 = vpop.f32.mrb[0].mxu0
      %v1792 = vadd.f32 %v1471, %v1791
      %v1793 = vpop.f32.mrb[0].mxu0
      %v1794 = vadd.f32 %v1475, %v1793
      %1795 = vmatprep.mubr.f32.mxu0 %v1329
      %1796 = vmatmul.mubr.f32.gmra.mrb[0].mxu0 %v1328
      %v1797 = vpop.f32.mrb[0].mxu0
      %v1798 = vadd.f32 %v1471, %v1797
      %v1799 = vpop.f32.mrb[0].mxu0
      %v1800 = vadd.f32 %v1475, %v1799
      %1801 = vdwg.mxu0
      %v1802 = vtanh.pop %v1547
      %v1803 = vtanh.pop %v1549
      %v1804 = vtanh.pop %v1708
      %v1805 = vtanh.pop %v1710
      %v1806 = vtanh.pop %v1553
      %v1807 = vtanh.pop %v1555
      %v1808 = vtanh.pop %v1714
      %v1809 = vtanh.pop %v1716
      %v1810 = vtanh.pop %v1559
      %v1811 = vtanh.pop %v1561
      %v1812 = vtanh.pop %v1720
      %v1813 = vtanh.pop %v1722
      %v1814 = vtanh.pop %v1565
      %v1815 = vtanh.pop %v1567
      %v1816 = vtanh.pop %v1726
      %v1817 = vtanh.pop %v1728
      %v1818 = vtanh.pop %v1571
      %v1819 = vtanh.pop %v1573
      %v1820 = vtanh.pop %v1732
      %v1821 = vtanh.pop %v1734
      %v1822 = vtanh.pop %v1577
      %v1823 = vtanh.pop %v1579
      %v1824 = vtanh.pop %v1738
      %v1825 = vtanh.pop %v1740
      %v1826 = vtanh.pop %v1583
      %v1827 = vtanh.pop %v1585
      %v1828 = vtanh.pop %v1744
      %v1829 = vtanh.pop %v1746
      %v1830 = vtanh.pop %v1589
      %v1831 = vtanh.pop %v1591
      %v1832 = vtanh.pop %v1750
      %v1833 = vtanh.pop %v1752
      %v1834 = vtanh.pop %v1595
      %v1835 = vtanh.pop %v1597
      %v1836 = vtanh.pop %v1756
      %v1837 = vtanh.pop %v1758
      %v1838 = vtanh.pop %v1601
      %v1839 = vtanh.pop %v1603
      %v1840 = vtanh.pop %v1762
      %v1841 = vtanh.pop %v1764
      %v1842 = vtanh.pop %v1607
      %v1843 = vtanh.pop %v1609
      %v1844 = vtanh.pop %v1768
      %v1845 = vtanh.pop %v1770
      %v1846 = vtanh.pop %v1613
      %v1847 = vtanh.pop %v1615
      %v1848 = vtanh.pop %v1774
      %v1849 = vtanh.pop %v1776
      %v1850 = vtanh.pop %v1619
      %v1851 = vtanh.pop %v1621
      %v1852 = vtanh.pop %v1780
      %v1853 = vtanh.pop %v1782
      %v1854 = vtanh.pop %v1625
      %v1855 = vtanh.pop %v1627
      %v1856 = vtanh.pop %v1786
      %v1857 = vtanh.pop %v1788
      %v1858 = vtanh.pop %v1631
      %v1859 = vtanh.pop %v1633
      %v1860 = vtanh.pop %v1792
      %v1861 = vtanh.pop %v1794
      %v1862 = vtanh.pop %v1637
      %v1863 = vtanh.pop %v1639
      %v1864 = vtanh.pop %v1798
      %v1865 = vtanh.pop %v1800
      %1866 = vst [vmem:[#allocation2] sm:$0xff] %v1802
      %1867 = vst [vmem:[#allocation2 + $0x8] sm:$0xff] %v1803
      %1868 = vst [vmem:[#allocation2 + $0x10] sm:$0xff] %v1804
      %1869 = vst [vmem:[#allocation2 + $0x18] sm:$0xff] %v1805
      %1870 = vst [vmem:[#allocation2 + $0x20] sm:$0xff] %v1806
      %1871 = vst [vmem:[#allocation2 + $0x28] sm:$0xff] %v1807
      %1872 = vst [vmem:[#allocation2 + $0x30] sm:$0xff] %v1808
      %1873 = vst [vmem:[#allocation2 + $0x38] sm:$0xff] %v1809
      %1874 = vst [vmem:[#allocation2 + $0x40] sm:$0xff] %v1810
      %1875 = vst [vmem:[#allocation2 + $0x48] sm:$0xff] %v1811
      %1876 = vst [vmem:[#allocation2 + $0x50] sm:$0xff] %v1812
      %1877 = vst [vmem:[#allocation2 + $0x58] sm:$0xff] %v1813
      %1878 = vst [vmem:[#allocation2 + $0x60] sm:$0xff] %v1814
      %1879 = vst [vmem:[#allocation2 + $0x68] sm:$0xff] %v1815
      %1880 = vst [vmem:[#allocation2 + $0x70] sm:$0xff] %v1816
      %1881 = vst [vmem:[#allocation2 + $0x78] sm:$0xff] %v1817
      %1882 = vst [vmem:[#allocation2 + $0x80] sm:$0xff] %v1818
      %1883 = vst [vmem:[#allocation2 + $0x88] sm:$0xff] %v1819
      %1884 = vst [vmem:[#allocation2 + $0x90] sm:$0xff] %v1820
      %1885 = vst [vmem:[#allocation2 + $0x98] sm:$0xff] %v1821
      %1886 = vst [vmem:[#allocation2 + $0xa0] sm:$0xff] %v1822
      %1887 = vst [vmem:[#allocation2 + $0xa8] sm:$0xff] %v1823
      %1888 = vst [vmem:[#allocation2 + $0xb0] sm:$0xff] %v1824
      %1889 = vst [vmem:[#allocation2 + $0xb8] sm:$0xff] %v1825
      %1890 = vst [vmem:[#allocation2 + $0xc0] sm:$0xff] %v1826
      %1891 = vst [vmem:[#allocation2 + $0xc8] sm:$0xff] %v1827
      %1892 = vst [vmem:[#allocation2 + $0xd0] sm:$0xff] %v1828
      %1893 = vst [vmem:[#allocation2 + $0xd8] sm:$0xff] %v1829
      %1894 = vst [vmem:[#allocation2 + $0xe0] sm:$0xff] %v1830
      %1895 = vst [vmem:[#allocation2 + $0xe8] sm:$0xff] %v1831
      %1896 = vst [vmem:[#allocation2 + $0xf0] sm:$0xff] %v1832
      %1897 = vst [vmem:[#allocation2 + $0xf8] sm:$0xff] %v1833
      %1898 = vst [vmem:[#allocation2 + $0x100] sm:$0xff] %v1834
      %1899 = vst [vmem:[#allocation2 + $0x108] sm:$0xff] %v1835
      %1900 = vst [vmem:[#allocation2 + $0x110] sm:$0xff] %v1836
      %1901 = vst [vmem:[#allocation2 + $0x118] sm:$0xff] %v1837
      %1902 = vst [vmem:[#allocation2 + $0x120] sm:$0xff] %v1838
      %1903 = vst [vmem:[#allocation2 + $0x128] sm:$0xff] %v1839
      %1904 = vst [vmem:[#allocation2 + $0x130] sm:$0xff] %v1840
      %1905 = vst [vmem:[#allocation2 + $0x138] sm:$0xff] %v1841
      %1906 = vst [vmem:[#allocation2 + $0x140] sm:$0xff] %v1842
      %1907 = vst [vmem:[#allocation2 + $0x148] sm:$0xff] %v1843
      %1908 = vst [vmem:[#allocation2 + $0x150] sm:$0xff] %v1844
      %1909 = vst [vmem:[#allocation2 + $0x158] sm:$0xff] %v1845
      %1910 = vst [vmem:[#allocation2 + $0x160] sm:$0xff] %v1846
      %1911 = vst [vmem:[#allocation2 + $0x168] sm:$0xff] %v1847
      %1912 = vst [vmem:[#allocation2 + $0x170] sm:$0xff] %v1848
      %1913 = vst [vmem:[#allocation2 + $0x178] sm:$0xff] %v1849
      %1914 = vst [vmem:[#allocation2 + $0x180] sm:$0xff] %v1850
      %1915 = vst [vmem:[#allocation2 + $0x188] sm:$0xff] %v1851
      %1916 = vst [vmem:[#allocation2 + $0x190] sm:$0xff] %v1852
      %1917 = vst [vmem:[#allocation2 + $0x198] sm:$0xff] %v1853
      %1918 = vst [vmem:[#allocation2 + $0x1a0] sm:$0xff] %v1854
      %1919 = vst [vmem:[#allocation2 + $0x1a8] sm:$0xff] %v1855
      %1920 = vst [vmem:[#allocation2 + $0x1b0] sm:$0xff] %v1856
      %1921 = vst [vmem:[#allocation2 + $0x1b8] sm:$0xff] %v1857
      %1922 = vst [vmem:[#allocation2 + $0x1c0] sm:$0xff] %v1858
      %1923 = vst [vmem:[#allocation2 + $0x1c8] sm:$0xff] %v1859
      %1924 = vst [vmem:[#allocation2 + $0x1d0] sm:$0xff] %v1860
      %1925 = vst [vmem:[#allocation2 + $0x1d8] sm:$0xff] %v1861
      %1926 = vst [vmem:[#allocation2 + $0x1e0] sm:$0xff] %v1862
      %1927 = vst [vmem:[#allocation2 + $0x1e8] sm:$0xff] %v1863
      %1928 = vst [vmem:[#allocation2 + $0x1f0] sm:$0xff] %v1864
      %1929 = vst [vmem:[#allocation2 + $0x1f8] sm:$0xff] %v1865
      %v1930 = vld [vmem:[#allocation2] sm:$0xff]
      %v1931 = vld [vmem:[#allocation2 + $0x8] sm:$0xff]
      %v1932 = vld [vmem:[#allocation2 + $0x10] sm:$0xff]
      %v1933 = vld [vmem:[#allocation2 + $0x18] sm:$0xff]
      %v1934 = vld [vmem:[#allocation2 + $0x20] sm:$0xff]
      %v1935 = vld [vmem:[#allocation2 + $0x28] sm:$0xff]
      %v1936 = vld [vmem:[#allocation2 + $0x30] sm:$0xff]
      %v1937 = vld [vmem:[#allocation2 + $0x38] sm:$0xff]
      %v1938 = vld [vmem:[#allocation2 + $0x40] sm:$0xff]
      %v1939 = vld [vmem:[#allocation2 + $0x48] sm:$0xff]
      %v1940 = vld [vmem:[#allocation2 + $0x50] sm:$0xff]
      %v1941 = vld [vmem:[#allocation2 + $0x58] sm:$0xff]
      %v1942 = vld [vmem:[#allocation2 + $0x60] sm:$0xff]
      %v1943 = vld [vmem:[#allocation2 + $0x68] sm:$0xff]
      %v1944 = vld [vmem:[#allocation2 + $0x70] sm:$0xff]
      %v1945 = vld [vmem:[#allocation2 + $0x78] sm:$0xff]
      %v1946 = vld [vmem:[#allocation2 + $0x80] sm:$0xff]
      %v1947 = vld [vmem:[#allocation2 + $0x88] sm:$0xff]
      %v1948 = vld [vmem:[#allocation2 + $0x90] sm:$0xff]
      %v1949 = vld [vmem:[#allocation2 + $0x98] sm:$0xff]
      %v1950 = vld [vmem:[#allocation2 + $0xa0] sm:$0xff]
      %v1951 = vld [vmem:[#allocation2 + $0xa8] sm:$0xff]
      %v1952 = vld [vmem:[#allocation2 + $0xb0] sm:$0xff]
      %v1953 = vld [vmem:[#allocation2 + $0xb8] sm:$0xff]
      %v1954 = vld [vmem:[#allocation2 + $0xc0] sm:$0xff]
      %v1955 = vld [vmem:[#allocation2 + $0xc8] sm:$0xff]
      %v1956 = vld [vmem:[#allocation2 + $0xd0] sm:$0xff]
      %v1957 = vld [vmem:[#allocation2 + $0xd8] sm:$0xff]
      %v1958 = vld [vmem:[#allocation2 + $0xe0] sm:$0xff]
      %v1959 = vld [vmem:[#allocation2 + $0xe8] sm:$0xff]
      %v1960 = vld [vmem:[#allocation2 + $0xf0] sm:$0xff]
      %v1961 = vld [vmem:[#allocation2 + $0xf8] sm:$0xff]
      %v1962 = vld [vmem:[#allocation2 + $0x100] sm:$0xff]
      %v1963 = vld [vmem:[#allocation2 + $0x108] sm:$0xff]
      %v1964 = vld [vmem:[#allocation2 + $0x110] sm:$0xff]
      %v1965 = vld [vmem:[#allocation2 + $0x118] sm:$0xff]
      %v1966 = vld [vmem:[#allocation2 + $0x120] sm:$0xff]
      %v1967 = vld [vmem:[#allocation2 + $0x128] sm:$0xff]
      %v1968 = vld [vmem:[#allocation2 + $0x130] sm:$0xff]
      %v1969 = vld [vmem:[#allocation2 + $0x138] sm:$0xff]
      %v1970 = vld [vmem:[#allocation2 + $0x140] sm:$0xff]
      %v1971 = vld [vmem:[#allocation2 + $0x148] sm:$0xff]
      %v1972 = vld [vmem:[#allocation2 + $0x150] sm:$0xff]
      %v1973 = vld [vmem:[#allocation2 + $0x158] sm:$0xff]
      %v1974 = vld [vmem:[#allocation2 + $0x160] sm:$0xff]
      %v1975 = vld [vmem:[#allocation2 + $0x168] sm:$0xff]
      %v1976 = vld [vmem:[#allocation2 + $0x170] sm:$0xff]
      %v1977 = vld [vmem:[#allocation2 + $0x178] sm:$0xff]
      %v1978 = vld [vmem:[#allocation2 + $0x180] sm:$0xff]
      %v1979 = vld [vmem:[#allocation2 + $0x188] sm:$0xff]
      %v1980 = vld [vmem:[#allocation2 + $0x190] sm:$0xff]
      %v1981 = vld [vmem:[#allocation2 + $0x198] sm:$0xff]
      %v1982 = vld [vmem:[#allocation2 + $0x1a0] sm:$0xff]
      %v1983 = vld [vmem:[#allocation2 + $0x1a8] sm:$0xff]
      %v1984 = vld [vmem:[#allocation2 + $0x1b0] sm:$0xff]
      %v1985 = vld [vmem:[#allocation2 + $0x1b8] sm:$0xff]
      %v1986 = vld [vmem:[#allocation2 + $0x1c0] sm:$0xff]
      %v1987 = vld [vmem:[#allocation2 + $0x1c8] sm:$0xff]
      %v1988 = vld [vmem:[#allocation2 + $0x1d0] sm:$0xff]
      %v1989 = vld [vmem:[#allocation2 + $0x1d8] sm:$0xff]
      %v1990 = vld [vmem:[#allocation2 + $0x1e0] sm:$0xff]
      %v1991 = vld [vmem:[#allocation2 + $0x1e8] sm:$0xff]
      %v1992 = vld [vmem:[#allocation2 + $0x1f0] sm:$0xff]
      %v1993 = vld [vmem:[#allocation2 + $0x1f8] sm:$0xff]
      %v1994 = vld [vmem:[%s5] sm:$0xff]
      %v1995 = vld [vmem:[%s5 + $0x8] sm:$0xff]
      %v1996 = vld [vmem:[%s5 + $0x10] sm:$0xff]
      %v1997 = vld [vmem:[%s5 + $0x18] sm:$0xff]
      %v1998 = vld [vmem:[%s5 + $0x20] sm:$0xff]
      %v1999 = vld [vmem:[%s5 + $0x28] sm:$0xff]
      %v2000 = vld [vmem:[%s5 + $0x30] sm:$0xff]
      %v2001 = vld [vmem:[%s5 + $0x38] sm:$0xff]
      %v2002 = vld [vmem:[%s5 + $0x40] sm:$0xff]
      %v2003 = vld [vmem:[%s5 + $0x48] sm:$0xff]
      %v2004 = vld [vmem:[%s5 + $0x50] sm:$0xff]
      %v2005 = vld [vmem:[%s5 + $0x58] sm:$0xff]
      %v2006 = vld [vmem:[%s5 + $0x60] sm:$0xff]
      %v2007 = vld [vmem:[%s5 + $0x68] sm:$0xff]
      %v2008 = vld [vmem:[%s5 + $0x70] sm:$0xff]
      %v2009 = vld [vmem:[%s5 + $0x78] sm:$0xff]
      %v2010 = vld [vmem:[%s5 + $0x80] sm:$0xff]
      %v2011 = vld [vmem:[%s5 + $0x88] sm:$0xff]
      %v2012 = vld [vmem:[%s5 + $0x90] sm:$0xff]
      %v2013 = vld [vmem:[%s5 + $0x98] sm:$0xff]
      %v2014 = vld [vmem:[%s5 + $0xa0] sm:$0xff]
      %v2015 = vld [vmem:[%s5 + $0xa8] sm:$0xff]
      %v2016 = vld [vmem:[%s5 + $0xb0] sm:$0xff]
      %v2017 = vld [vmem:[%s5 + $0xb8] sm:$0xff]
      %v2018 = vld [vmem:[%s5 + $0xc0] sm:$0xff]
      %v2019 = vld [vmem:[%s5 + $0xc8] sm:$0xff]
      %v2020 = vld [vmem:[%s5 + $0xd0] sm:$0xff]
      %v2021 = vld [vmem:[%s5 + $0xd8] sm:$0xff]
      %v2022 = vld [vmem:[%s5 + $0xe0] sm:$0xff]
      %v2023 = vld [vmem:[%s5 + $0xe8] sm:$0xff]
      %v2024 = vld [vmem:[%s5 + $0xf0] sm:$0xff]
      %v2025 = vld [vmem:[%s5 + $0xf8] sm:$0xff]
      %v2026 = vld [vmem:[%s5 + $0x100] sm:$0xff]
      %v2027 = vld [vmem:[%s5 + $0x108] sm:$0xff]
      %v2028 = vld [vmem:[%s5 + $0x110] sm:$0xff]
      %v2029 = vld [vmem:[%s5 + $0x118] sm:$0xff]
      %v2030 = vld [vmem:[%s5 + $0x120] sm:$0xff]
      %v2031 = vld [vmem:[%s5 + $0x128] sm:$0xff]
      %v2032 = vld [vmem:[%s5 + $0x130] sm:$0xff]
      %v2033 = vld [vmem:[%s5 + $0x138] sm:$0xff]
      %v2034 = vld [vmem:[%s5 + $0x140] sm:$0xff]
      %v2035 = vld [vmem:[%s5 + $0x148] sm:$0xff]
      %v2036 = vld [vmem:[%s5 + $0x150] sm:$0xff]
      %v2037 = vld [vmem:[%s5 + $0x158] sm:$0xff]
      %v2038 = vld [vmem:[%s5 + $0x160] sm:$0xff]
      %v2039 = vld [vmem:[%s5 + $0x168] sm:$0xff]
      %v2040 = vld [vmem:[%s5 + $0x170] sm:$0xff]
      %v2041 = vld [vmem:[%s5 + $0x178] sm:$0xff]
      %v2042 = vld [vmem:[%s5 + $0x180] sm:$0xff]
      %v2043 = vld [vmem:[%s5 + $0x188] sm:$0xff]
      %v2044 = vld [vmem:[%s5 + $0x190] sm:$0xff]
      %v2045 = vld [vmem:[%s5 + $0x198] sm:$0xff]
      %v2046 = vld [vmem:[%s5 + $0x1a0] sm:$0xff]
      %v2047 = vld [vmem:[%s5 + $0x1a8] sm:$0xff]
      %v2048 = vld [vmem:[%s5 + $0x1b0] sm:$0xff]
      %v2049 = vld [vmem:[%s5 + $0x1b8] sm:$0xff]
      %v2050 = vld [vmem:[%s5 + $0x1c0] sm:$0xff]
      %v2051 = vld [vmem:[%s5 + $0x1c8] sm:$0xff]
      %v2052 = vld [vmem:[%s5 + $0x1d0] sm:$0xff]
      %v2053 = vld [vmem:[%s5 + $0x1d8] sm:$0xff]
      %v2054 = vld [vmem:[%s5 + $0x1e0] sm:$0xff]
      %v2055 = vld [vmem:[%s5 + $0x1e8] sm:$0xff]
      %v2056 = vld [vmem:[%s5 + $0x1f0] sm:$0xff]
      %v2057 = vld [vmem:[%s5 + $0x1f8] sm:$0xff]
      %v2058 = vld [vmem:[%s6] sm:$0x1]
      %v2060 = vlaneseq
      %v2061 = vshrl.u32 %v2060, 7
      %v2062 = vsub.s32 0, %v2061
      %v2063 = vrot.slane %v2058, %v2062
      %2065 = vmatprep.subr.mxu0 0.0
      %2066 = vmatpush1.msra.mxu0 %v1994
      %2067 = vmatprep.subr.mxu0 0.0
      %2068 = vmatpush1.msra.mxu0 %v1995
      %2069 = vmatprep.subr.mxu0 0.0
      %2070 = vmatpush1.msra.mxu0 %v1996
      %2071 = vmatprep.subr.mxu0 0.0
      %2072 = vmatpush1.msra.mxu0 %v1997
      %2073 = vmatprep.subr.mxu0 0.0
      %2074 = vmatpush1.msra.mxu0 %v1998
      %2075 = vmatprep.subr.mxu0 0.0
      %2076 = vmatpush1.msra.mxu0 %v1999
      %2077 = vmatprep.subr.mxu0 0.0
      %2078 = vmatpush1.msra.mxu0 %v2000
      %2079 = vmatprep.subr.mxu0 0.0
      %2080 = vmatpush1.msra.mxu0 %v2001
      %2081 = vmatprep.subr.mxu0 0.0
      %2082 = vmatpush1.msra.mxu0 %v2002
      %2083 = vmatprep.subr.mxu0 0.0
      %2084 = vmatpush1.msra.mxu0 %v2003
      %2085 = vmatprep.subr.mxu0 0.0
      %2086 = vmatpush1.msra.mxu0 %v2004
      %2087 = vmatprep.subr.mxu0 0.0
      %2088 = vmatpush1.msra.mxu0 %v2005
      %2089 = vmatprep.subr.mxu0 0.0
      %2090 = vmatpush1.msra.mxu0 %v2006
      %2091 = vmatprep.subr.mxu0 0.0
      %2092 = vmatpush1.msra.mxu0 %v2007
      %2093 = vmatprep.subr.mxu0 0.0
      %2094 = vmatpush1.msra.mxu0 %v2008
      %2095 = vmatprep.subr.mxu0 0.0
      %2096 = vmatpush1.msra.mxu0 %v2009
      %2097 = vmatprep.subr.mxu0 0.0
      %2098 = vmatpush1.msra.mxu0 %v2010
      %2099 = vmatprep.subr.mxu0 0.0
      %2100 = vmatpush1.msra.mxu0 %v2011
      %2101 = vmatprep.subr.mxu0 0.0
      %2102 = vmatpush1.msra.mxu0 %v2012
      %2103 = vmatprep.subr.mxu0 0.0
      %2104 = vmatpush1.msra.mxu0 %v2013
      %2105 = vmatprep.subr.mxu0 0.0
      %2106 = vmatpush1.msra.mxu0 %v2014
      %2107 = vmatprep.subr.mxu0 0.0
      %2108 = vmatpush1.msra.mxu0 %v2015
      %2109 = vmatprep.subr.mxu0 0.0
      %2110 = vmatpush1.msra.mxu0 %v2016
      %2111 = vmatprep.subr.mxu0 0.0
      %2112 = vmatpush1.msra.mxu0 %v2017
      %2113 = vmatprep.subr.mxu0 0.0
      %2114 = vmatpush1.msra.mxu0 %v2018
      %2115 = vmatprep.subr.mxu0 0.0
      %2116 = vmatpush1.msra.mxu0 %v2019
      %2117 = vmatprep.subr.mxu0 0.0
      %2118 = vmatpush1.msra.mxu0 %v2020
      %2119 = vmatprep.subr.mxu0 0.0
      %2120 = vmatpush1.msra.mxu0 %v2021
      %2121 = vmatprep.subr.mxu0 0.0
      %2122 = vmatpush1.msra.mxu0 %v2022
      %2123 = vmatprep.subr.mxu0 0.0
      %2124 = vmatpush1.msra.mxu0 %v2023
      %2125 = vmatprep.subr.mxu0 0.0
      %2126 = vmatpush1.msra.mxu0 %v2024
      %2127 = vmatprep.subr.mxu0 0.0
      %2128 = vmatpush1.msra.mxu0 %v2025
      %2129 = vmatprep.mubr.f32.mxu0 %v1931
      %2130 = vmatmul.mubr.f32.gmra.mrb[0].mxu0 %v1930
      %v2131 = vpop.f32.mrb[0].mxu0
      %v2132 = vadd.f32 %v2063, %v2131
      %v2133 = vpop.f32.mrb[0].mxu0
      %2134 = vmatprep.mubr.f32.mxu0 %v1935
      %2135 = vmatmul.mubr.f32.gmra.mrb[0].mxu0 %v1934
      %v2136 = vpop.f32.mrb[0].mxu0
      %v2137 = vadd.f32 %v2063, %v2136
      %v2138 = vpop.f32.mrb[0].mxu0
      %2139 = vmatprep.mubr.f32.mxu0 %v1939
      %2140 = vmatmul.mubr.f32.gmra.mrb[0].mxu0 %v1938
      %v2141 = vpop.f32.mrb[0].mxu0
      %v2142 = vadd.f32 %v2063, %v2141
      %v2143 = vpop.f32.mrb[0].mxu0
      %2144 = vmatprep.mubr.f32.mxu0 %v1943
      %2145 = vmatmul.mubr.f32.gmra.mrb[0].mxu0 %v1942
      %v2146 = vpop.f32.mrb[0].mxu0
      %v2147 = vadd.f32 %v2063, %v2146
      %v2148 = vpop.f32.mrb[0].mxu0
      %2149 = vmatprep.mubr.f32.mxu0 %v1947
      %2150 = vmatmul.mubr.f32.gmra.mrb[0].mxu0 %v1946
      %v2151 = vpop.f32.mrb[0].mxu0
      %v2152 = vadd.f32 %v2063, %v2151
      %v2153 = vpop.f32.mrb[0].mxu0
      %2154 = vmatprep.mubr.f32.mxu0 %v1951
      %2155 = vmatmul.mubr.f32.gmra.mrb[0].mxu0 %v1950
      %v2156 = vpop.f32.mrb[0].mxu0
      %v2157 = vadd.f32 %v2063, %v2156
      %v2158 = vpop.f32.mrb[0].mxu0
      %2159 = vmatprep.mubr.f32.mxu0 %v1955
      %2160 = vmatmul.mubr.f32.gmra.mrb[0].mxu0 %v1954
      %v2161 = vpop.f32.mrb[0].mxu0
      %v2162 = vadd.f32 %v2063, %v2161
      %v2163 = vpop.f32.mrb[0].mxu0
      %2164 = vmatprep.mubr.f32.mxu0 %v1959
      %2165 = vmatmul.mubr.f32.gmra.mrb[0].mxu0 %v1958
      %v2166 = vpop.f32.mrb[0].mxu0
      %v2167 = vadd.f32 %v2063, %v2166
      %v2168 = vpop.f32.mrb[0].mxu0
      %2169 = vmatprep.mubr.f32.mxu0 %v1963
      %2170 = vmatmul.mubr.f32.gmra.mrb[0].mxu0 %v1962
      %v2171 = vpop.f32.mrb[0].mxu0
      %v2172 = vadd.f32 %v2063, %v2171
      %v2173 = vpop.f32.mrb[0].mxu0
      %2174 = vmatprep.mubr.f32.mxu0 %v1967
      %2175 = vmatmul.mubr.f32.gmra.mrb[0].mxu0 %v1966
      %v2176 = vpop.f32.mrb[0].mxu0
      %v2177 = vadd.f32 %v2063, %v2176
      %v2178 = vpop.f32.mrb[0].mxu0
      %2179 = vmatprep.mubr.f32.mxu0 %v1971
      %2180 = vmatmul.mubr.f32.gmra.mrb[0].mxu0 %v1970
      %v2181 = vpop.f32.mrb[0].mxu0
      %v2182 = vadd.f32 %v2063, %v2181
      %v2183 = vpop.f32.mrb[0].mxu0
      %2184 = vmatprep.mubr.f32.mxu0 %v1975
      %2185 = vmatmul.mubr.f32.gmra.mrb[0].mxu0 %v1974
      %v2186 = vpop.f32.mrb[0].mxu0
      %v2187 = vadd.f32 %v2063, %v2186
      %v2188 = vpop.f32.mrb[0].mxu0
      %2189 = vmatprep.mubr.f32.mxu0 %v1979
      %2190 = vmatmul.mubr.f32.gmra.mrb[0].mxu0 %v1978
      %v2191 = vpop.f32.mrb[0].mxu0
      %v2192 = vadd.f32 %v2063, %v2191
      %v2193 = vpop.f32.mrb[0].mxu0
      %2194 = vmatprep.mubr.f32.mxu0 %v1983
      %2195 = vmatmul.mubr.f32.gmra.mrb[0].mxu0 %v1982
      %v2196 = vpop.f32.mrb[0].mxu0
      %v2197 = vadd.f32 %v2063, %v2196
      %v2198 = vpop.f32.mrb[0].mxu0
      %2199 = vmatprep.mubr.f32.mxu0 %v1987
      %2200 = vmatmul.mubr.f32.gmra.mrb[0].mxu0 %v1986
      %v2201 = vpop.f32.mrb[0].mxu0
      %v2202 = vadd.f32 %v2063, %v2201
      %v2203 = vpop.f32.mrb[0].mxu0
      %2204 = vmatprep.mubr.f32.mxu0 %v1991
      %2205 = vmatmul.mubr.f32.gmra.mrb[0].mxu0 %v1990
      %v2206 = vpop.f32.mrb[0].mxu0
      %v2207 = vadd.f32 %v2063, %v2206
      %v2208 = vpop.f32.mrb[0].mxu0
      %2209 = vdwg.mxu0
      %2210 = vmatprep.subr.mxu0 0.0
      %2211 = vmatpush1.msra.mxu0 %v2026
      %2212 = vmatprep.subr.mxu0 0.0
      %2213 = vmatpush1.msra.mxu0 %v2027
      %2214 = vmatprep.subr.mxu0 0.0
      %2215 = vmatpush1.msra.mxu0 %v2028
      %2216 = vmatprep.subr.mxu0 0.0
      %2217 = vmatpush1.msra.mxu0 %v2029
      %2218 = vmatprep.subr.mxu0 0.0
      %2219 = vmatpush1.msra.mxu0 %v2030
      %2220 = vmatprep.subr.mxu0 0.0
      %2221 = vmatpush1.msra.mxu0 %v2031
      %2222 = vmatprep.subr.mxu0 0.0
      %2223 = vmatpush1.msra.mxu0 %v2032
      %2224 = vmatprep.subr.mxu0 0.0
      %2225 = vmatpush1.msra.mxu0 %v2033
      %2226 = vmatprep.subr.mxu0 0.0
      %2227 = vmatpush1.msra.mxu0 %v2034
      %2228 = vmatprep.subr.mxu0 0.0
      %2229 = vmatpush1.msra.mxu0 %v2035
      %2230 = vmatprep.subr.mxu0 0.0
      %2231 = vmatpush1.msra.mxu0 %v2036
      %2232 = vmatprep.subr.mxu0 0.0
      %2233 = vmatpush1.msra.mxu0 %v2037
      %2234 = vmatprep.subr.mxu0 0.0
      %2235 = vmatpush1.msra.mxu0 %v2038
      %2236 = vmatprep.subr.mxu0 0.0
      %2237 = vmatpush1.msra.mxu0 %v2039
      %2238 = vmatprep.subr.mxu0 0.0
      %2239 = vmatpush1.msra.mxu0 %v2040
      %2240 = vmatprep.subr.mxu0 0.0
      %2241 = vmatpush1.msra.mxu0 %v2041
      %2242 = vmatprep.subr.mxu0 0.0
      %2243 = vmatpush1.msra.mxu0 %v2042
      %2244 = vmatprep.subr.mxu0 0.0
      %2245 = vmatpush1.msra.mxu0 %v2043
      %2246 = vmatprep.subr.mxu0 0.0
      %2247 = vmatpush1.msra.mxu0 %v2044
      %2248 = vmatprep.subr.mxu0 0.0
      %2249 = vmatpush1.msra.mxu0 %v2045
      %2250 = vmatprep.subr.mxu0 0.0
      %2251 = vmatpush1.msra.mxu0 %v2046
      %2252 = vmatprep.subr.mxu0 0.0
      %2253 = vmatpush1.msra.mxu0 %v2047
      %2254 = vmatprep.subr.mxu0 0.0
      %2255 = vmatpush1.msra.mxu0 %v2048
      %2256 = vmatprep.subr.mxu0 0.0
      %2257 = vmatpush1.msra.mxu0 %v2049
      %2258 = vmatprep.subr.mxu0 0.0
      %2259 = vmatpush1.msra.mxu0 %v2050
      %2260 = vmatprep.subr.mxu0 0.0
      %2261 = vmatpush1.msra.mxu0 %v2051
      %2262 = vmatprep.subr.mxu0 0.0
      %2263 = vmatpush1.msra.mxu0 %v2052
      %2264 = vmatprep.subr.mxu0 0.0
      %2265 = vmatpush1.msra.mxu0 %v2053
      %2266 = vmatprep.subr.mxu0 0.0
      %2267 = vmatpush1.msra.mxu0 %v2054
      %2268 = vmatprep.subr.mxu0 0.0
      %2269 = vmatpush1.msra.mxu0 %v2055
      %2270 = vmatprep.subr.mxu0 0.0
      %2271 = vmatpush1.msra.mxu0 %v2056
      %2272 = vmatprep.subr.mxu0 0.0
      %2273 = vmatpush1.msra.mxu0 %v2057
      %2274 = vmatprep.mubr.f32.mxu0 %v1933
      %2275 = vmatmul.mubr.f32.gmra.mrb[0].mxu0 %v1932
      %v2276 = vpop.f32.mrb[0].mxu0
      %v2277 = vadd.f32 %v2132, %v2276
      %v2278 = vpop.f32.mrb[0].mxu0
      %2279 = vmatprep.mubr.f32.mxu0 %v1937
      %2280 = vmatmul.mubr.f32.gmra.mrb[0].mxu0 %v1936
      %v2281 = vpop.f32.mrb[0].mxu0
      %v2282 = vadd.f32 %v2137, %v2281
      %v2283 = vpop.f32.mrb[0].mxu0
      %2284 = vmatprep.mubr.f32.mxu0 %v1941
      %2285 = vmatmul.mubr.f32.gmra.mrb[0].mxu0 %v1940
      %v2286 = vpop.f32.mrb[0].mxu0
      %v2287 = vadd.f32 %v2142, %v2286
      %v2288 = vpop.f32.mrb[0].mxu0
      %2289 = vmatprep.mubr.f32.mxu0 %v1945
      %2290 = vmatmul.mubr.f32.gmra.mrb[0].mxu0 %v1944
      %v2291 = vpop.f32.mrb[0].mxu0
      %v2292 = vadd.f32 %v2147, %v2291
      %v2293 = vpop.f32.mrb[0].mxu0
      %2294 = vmatprep.mubr.f32.mxu0 %v1949
      %2295 = vmatmul.mubr.f32.gmra.mrb[0].mxu0 %v1948
      %v2296 = vpop.f32.mrb[0].mxu0
      %v2297 = vadd.f32 %v2152, %v2296
      %v2298 = vpop.f32.mrb[0].mxu0
      %2299 = vmatprep.mubr.f32.mxu0 %v1953
      %2300 = vmatmul.mubr.f32.gmra.mrb[0].mxu0 %v1952
      %v2301 = vpop.f32.mrb[0].mxu0
      %v2302 = vadd.f32 %v2157, %v2301
      %v2303 = vpop.f32.mrb[0].mxu0
      %2304 = vmatprep.mubr.f32.mxu0 %v1957
      %2305 = vmatmul.mubr.f32.gmra.mrb[0].mxu0 %v1956
      %v2306 = vpop.f32.mrb[0].mxu0
      %v2307 = vadd.f32 %v2162, %v2306
      %v2308 = vpop.f32.mrb[0].mxu0
      %2309 = vmatprep.mubr.f32.mxu0 %v1961
      %2310 = vmatmul.mubr.f32.gmra.mrb[0].mxu0 %v1960
      %v2311 = vpop.f32.mrb[0].mxu0
      %v2312 = vadd.f32 %v2167, %v2311
      %v2313 = vpop.f32.mrb[0].mxu0
      %2314 = vmatprep.mubr.f32.mxu0 %v1965
      %2315 = vmatmul.mubr.f32.gmra.mrb[0].mxu0 %v1964
      %v2316 = vpop.f32.mrb[0].mxu0
      %v2317 = vadd.f32 %v2172, %v2316
      %v2318 = vpop.f32.mrb[0].mxu0
      %2319 = vmatprep.mubr.f32.mxu0 %v1969
      %2320 = vmatmul.mubr.f32.gmra.mrb[0].mxu0 %v1968
      %v2321 = vpop.f32.mrb[0].mxu0
      %v2322 = vadd.f32 %v2177, %v2321
      %v2323 = vpop.f32.mrb[0].mxu0
      %2324 = vmatprep.mubr.f32.mxu0 %v1973
      %2325 = vmatmul.mubr.f32.gmra.mrb[0].mxu0 %v1972
      %v2326 = vpop.f32.mrb[0].mxu0
      %v2327 = vadd.f32 %v2182, %v2326
      %v2328 = vpop.f32.mrb[0].mxu0
      %2329 = vmatprep.mubr.f32.mxu0 %v1977
      %2330 = vmatmul.mubr.f32.gmra.mrb[0].mxu0 %v1976
      %v2331 = vpop.f32.mrb[0].mxu0
      %v2332 = vadd.f32 %v2187, %v2331
      %v2333 = vpop.f32.mrb[0].mxu0
      %2334 = vmatprep.mubr.f32.mxu0 %v1981
      %2335 = vmatmul.mubr.f32.gmra.mrb[0].mxu0 %v1980
      %v2336 = vpop.f32.mrb[0].mxu0
      %v2337 = vadd.f32 %v2192, %v2336
      %v2338 = vpop.f32.mrb[0].mxu0
      %2339 = vmatprep.mubr.f32.mxu0 %v1985
      %2340 = vmatmul.mubr.f32.gmra.mrb[0].mxu0 %v1984
      %v2341 = vpop.f32.mrb[0].mxu0
      %v2342 = vadd.f32 %v2197, %v2341
      %v2343 = vpop.f32.mrb[0].mxu0
      %2344 = vmatprep.mubr.f32.mxu0 %v1989
      %2345 = vmatmul.mubr.f32.gmra.mrb[0].mxu0 %v1988
      %v2346 = vpop.f32.mrb[0].mxu0
      %v2347 = vadd.f32 %v2202, %v2346
      %v2348 = vpop.f32.mrb[0].mxu0
      %2349 = vmatprep.mubr.f32.mxu0 %v1993
      %2350 = vmatmul.mubr.f32.gmra.mrb[0].mxu0 %v1992
      %v2351 = vpop.f32.mrb[0].mxu0
      %v2352 = vadd.f32 %v2207, %v2351
      %v2353 = vpop.f32.mrb[0].mxu0
      %2354 = vdwg.mxu0
      %vm2355 = vcmask 31744
      %2356 = vst.msk [vmem:[%s283] sm:$0xff] %vm2355, %v2277
      %2357 = vst.msk [vmem:[%s283 + $0x8] sm:$0xff] %vm2355, %v2282
      %2358 = vst.msk [vmem:[%s283 + $0x10] sm:$0xff] %vm2355, %v2287
      %2359 = vst.msk [vmem:[%s283 + $0x18] sm:$0xff] %vm2355, %v2292
      %2360 = vst.msk [vmem:[%s283 + $0x20] sm:$0xff] %vm2355, %v2297
      %2361 = vst.msk [vmem:[%s283 + $0x28] sm:$0xff] %vm2355, %v2302
      %2362 = vst.msk [vmem:[%s283 + $0x30] sm:$0xff] %vm2355, %v2307
      %2363 = vst.msk [vmem:[%s283 + $0x38] sm:$0xff] %vm2355, %v2312
      %2364 = vst.msk [vmem:[%s283 + $0x40] sm:$0xff] %vm2355, %v2317
      %2365 = vst.msk [vmem:[%s283 + $0x48] sm:$0xff] %vm2355, %v2322
      %2366 = vst.msk [vmem:[%s283 + $0x50] sm:$0xff] %vm2355, %v2327
      %2367 = vst.msk [vmem:[%s283 + $0x58] sm:$0xff] %vm2355, %v2332
      %2368 = vst.msk [vmem:[%s283 + $0x60] sm:$0xff] %vm2355, %v2337
      %2369 = vst.msk [vmem:[%s283 + $0x68] sm:$0xff] %vm2355, %v2342
      %2370 = vst.msk [vmem:[%s283 + $0x70] sm:$0xff] %vm2355, %v2347
      %2371 = vst.msk [vmem:[%s283 + $0x78] sm:$0xff] %vm2355, %v2352
      %s2372 = smul.u32 16, %s18
      %p2373 = scmp.lt.s32.totalorder %s2372, 31
      %s2374 = scalar_select %p2373, %s2372, 31
      %s2375 = smul.addr %s2374, 8
      %s2376 = scalar_lea.vmem %s7, %s2375
      // Predicated region
      $region49: #{tpu_custom_call.1} parent=47 // pred_check
        %p2377 = pneg %p188
      $region50: #{tpu_custom_call.1} parent=47 // pred_check_branch
        %2379 = sbr.rel (%p2377) target = $region52
      $region51: #{tpu_custom_call.1} parent=47 // pred_region
        %s2380 = smul.u32 16, %s18
      $region52: #{tpu_custom_call.1} parent=47 // pred_fallthru
        _
    $region48: #{tpu_custom_call.1} parent=5 // pred_fallthru
      _
    %p2381 = scmp.le.s32.totalorder 2, %s13
    // Predicated region
    $region53: #{tpu_custom_call.1} parent=5 // pred_check
      %p2382 = pneg %p2381
    $region54: #{tpu_custom_call.1} parent=5 // pred_check_branch
      %2384 = sbr.rel (%p2382) target = $region56
    $region55: #{tpu_custom_call.1} parent=5 // pred_region
      %s2385 = ssub.s32 %s13, 2
      // Predicated region
      $region57: #{tpu_custom_call.1} parent=55 // pred_check
        %p2386 = pneg %p194
      $region58: #{tpu_custom_call.1} parent=55 // pred_check_branch
        %2388 = sbr.rel (%p2386) target = $region60
      $region59: #{tpu_custom_call.1} parent=55 // pred_region
        %s2389 = smul.u32 16, %s19
        %p2390 = scmp.lt.s32.totalorder %s2389, 31
        %s2391 = scalar_select %p2390, %s2389, 31
        %s2392 = smul.addr %s2391, 8
        %s2393 = scalar_lea.vmem %s7, %s2392
      $region60: #{tpu_custom_call.1} parent=55 // pred_fallthru
        _
    $region56: #{tpu_custom_call.1} parent=5 // pred_fallthru
      _
  $region6: #{tpu_custom_call.1} parent=0 // loop_footer
    %s17 = sadd.s32 1, %s13
  $region7: #{tpu_custom_call.1} parent=0 // loop_footer_branch
    %12 = sbr.rel target = $region3
  $region8: #{tpu_custom_call.1} parent=0 // loop_exit
    _

</llo_original>
